<compile_context>
chip_gen: v5e
topology: v5e:2x2
jax: 0.10.0
libtpu: 0.0.40
codegen_flags: <defaults>
</compile_context>

<pallas_src>
import math
import functools

import jax
import jax.numpy as jnp
import numpy as np
from jax.experimental import pallas as pl
from jax.experimental.pallas import tpu as pltpu


def _round_up(x, m):
    return ((x + m - 1) // m) * m


# ----------------------------- Pallas kernel --------------------------------
def _soft_hebb_conv_kernel(x_ref, w_ref, o_ref, patch_ref, *,
                           Bblk, Cp, kh, kw, dil, Wp, Lwp):
    """One grid step = one batch block of Bblk images.

    x_ref:     (Bblk, Cp, Lxpad)  bf16  reflect-padded, spatially-flat images
    w_ref:     (O, K)             bf16  flattened conv weights (K = kh*kw*Cp)
    o_ref:     (Bblk, O, Lwp)     f32   'wide' (stride-1, row-stride Wp) output
    patch_ref: (K, Bblk*Lwp)      bf16  VMEM scratch: in-kernel im2col matrix
    """
    # In-kernel im2col: one sublane-aligned, lane-dense (Cp, Lwp) slab copy per
    # (tap, image).  Offsets are static Python ints -> static slices, unrolled
    # at trace time.  Destination column offsets (b*Lwp) and widths (Lwp) are
    # multiples of 128, so stores are unmasked; only the source lane shift
    # (off) is misaligned (unavoidable for a conv).
    for ph in range(kh):
        for pw in range(kw):
            t = ph * kw + pw
            off = dil * (ph * Wp + pw)
            for b in range(Bblk):
                patch_ref[t * Cp:(t + 1) * Cp, b * Lwp:(b + 1) * Lwp] = (
                    x_ref[b, :, off:off + Lwp])
    # TODO(synk): on v5e (single store slot) overlap this build with the GEMM
    # (e.g. split K and interleave tap copies with partial matmuls).

    # Single fat lane-dense bf16 GEMM on the MXU, f32 accumulate.
    res = jnp.dot(w_ref[...], patch_ref[...],
                  preferred_element_type=jnp.float32)

    # Unfuse the batch from the GEMM's N dim; every slice is 128-aligned.
    for b in range(Bblk):
        o_ref[b, :, :] = res[:, b * Lwp:(b + 1) * Lwp]


# ------------------------- SoftHebbConv2d forward ----------------------------
def soft_hebb_conv2d_forward(x, weight, *, stride=1, padding=0, dilation=1,
                             groups=1, batch_block=None):
    """Forward pass of SoftHebbConv2d (eval mode).

    x:      (B, C, H, W)   float32, NCHW
    weight: (O, C, kh, kw) float32, OIHW
    returns (B, O, Ho, Wo) float32 (NCHW), matching
            F.conv2d(F.pad(x, pad, 'reflect'), weight, None, stride, 0, dilation).
    """
    assert groups == 1  # TODO(synk): grouped conv not implemented.
    B, C, H, W = x.shape
    O, Cw, kh, kw = weight.shape
    assert Cw == C
    s, d, p = stride, dilation, padding
    assert s >= 1 and d >= 1 and p >= 0
    # Reflect padding requires p <= dim-1 (same constraint as torch).
    assert p <= H - 1 and p <= W - 1, "reflect padding requires p <= H-1, W-1"

    xp = jnp.pad(x, ((0, 0), (0, 0), (p, p), (p, p)), mode="reflect")
    Hp, Wp = H + 2 * p, W + 2 * p

    # Dense (stride-1) output extents; the strided output is a subsample.
    Ho1 = Hp - d * (kh - 1)
    Wo1 = Wp - d * (kw - 1)
    assert Ho1 >= 1 and Wo1 >= 1

    Cp = _round_up(C, 8)                  # sublane-aligned per-tap scratch rows
    K = kh * kw * Cp                      # contraction dim (NOT padded to 128)
    Lw = Ho1 * Wp                         # per-image 'wide' flat output length
    Lwp = _round_up(Lw, 128)              # lane-dense per-image output segment
    max_off = d * ((kh - 1) * Wp + (kw - 1))
    Lxpad = _round_up(max_off + Lwp, 128)  # flat input length incl. shift slack

    # bf16 input stream, spatially flattened, channel + length zero-padded.
    x_flat = xp.astype(jnp.bfloat16).reshape(B, C, Hp * Wp)
    x_flat = jnp.pad(x_flat, ((0, 0), (0, Cp - C), (0, Lxpad - Hp * Wp)))

    # Weights -> (O, kh*kw*Cp), row order matching the in-kernel patch rows
    # (tap-major, channel-minor), channel zero-padded, bf16.
    w_mat = jnp.pad(weight.transpose(0, 2, 3, 1),           # (O, kh, kw, C)
                    ((0, 0), (0, 0), (0, 0), (0, Cp - C)))   # (O, kh, kw, Cp)
    w_mat = w_mat.reshape(O, K).astype(jnp.bfloat16)

    # ---- pick how many images share a grid step (fatter GEMM N) ------------
    patch_bytes_per_img = K * Lwp * 2                        # bf16 scratch
    io_bytes_per_img = 2 * (Cp * Lxpad * 2 + O * Lwp * 4)    # dbl-buffered x+out
    w_bytes = 2 * O * K * 2                                  # dbl-buffered weights
    budget = 24 * 1024 * 1024          # stay well below 32 MiB scoped default
    if batch_block is None:
        batch_block = 1
        for bb in range(B, 0, -1):
            if (B % bb == 0 and
                    bb * (patch_bytes_per_img + io_bytes_per_img) + w_bytes
                    <= budget):
                batch_block = bb
                break
    Bblk = batch_block
    assert B % Bblk == 0, "batch_block must divide the batch size"
    nb = B // Bblk

    vmem_needed = Bblk * (patch_bytes_per_img + io_bytes_per_img) + w_bytes
    vmem_limit = int(min(64 * 1024 * 1024,
                         max(32 * 1024 * 1024, 2 * vmem_needed)))

    kernel = functools.partial(
        _soft_hebb_conv_kernel,
        Bblk=Bblk, Cp=Cp, kh=kh, kw=kw, dil=d, Wp=Wp, Lwp=Lwp)

    out_wide = pl.pallas_call(
        kernel,
        out_shape=jax.ShapeDtypeStruct((B, O, Lwp), jnp.float32),
        grid=(nb,),
        in_specs=[
            pl.BlockSpec((Bblk, Cp, Lxpad), lambda g: (g, 0, 0)),
            # Constant-index weight block; NOTE: once O*K grows, fold into a
            # persistent scratch or pipeline_mode=pl.Buffered(1) to save VMEM.
            pl.BlockSpec((O, K), lambda g: (0, 0)),
        ],
        out_specs=pl.BlockSpec((Bblk, O, Lwp), lambda g: (g, 0, 0)),
        scratch_shapes=[pltpu.VMEM((K, Bblk * Lwp), jnp.bfloat16)],
        compiler_params=pltpu.CompilerParams(
            dimension_semantics=("parallel",),
            vmem_limit_bytes=vmem_limit),
    )(x_flat, w_mat)

    # Undo the 'wide' flat index: each output row used stride Wp, only the
    # first Wo1 columns are valid.  Result is already NCHW (no transpose).
    out = out_wide[:, :, :Lw].reshape(B, O, Ho1, Wp)[:, :, :, :Wo1]
    if s != 1:
        out = out[:, :, ::s, ::s]
    return out


# ------------------------------------ main -----------------------------------
if __name__ == "__main__":
    # Module config (small, consistent with SoftHebbConv2d.__init__).
    in_channels = 4
    out_channels = 16
    kernel_size = 5
    stride = 1
    padding = 2
    dilation = 1
    groups = 1

    B, H, W = 2, 16, 16

    key = jax.random.PRNGKey(0)
    kx, kw_key = jax.random.split(key)

    x = jax.random.normal(kx, (B, in_channels, H, W), dtype=jnp.float32)

    weight_range = 25 / math.sqrt(
        in_channels / groups * kernel_size * kernel_size)
    weight = weight_range * jax.random.normal(
        kw_key,
        (out_channels, in_channels // groups, kernel_size, kernel_size),
        dtype=jnp.float32)

    fwd = jax.jit(
        functools.partial(
            soft_hebb_conv2d_forward,
            stride=stride, padding=padding, dilation=dilation, groups=groups))
    out = fwd(x, weight)
    jax.block_until_ready(out)

    # Sanity check against XLA's conv on the reflect-padded input.  The kernel
    # uses bf16 inputs with f32 accumulation, so tolerances are relaxed
    # accordingly (outputs have std ~ 25 here).
    xp = jnp.pad(x, ((0, 0), (0, 0), (padding, padding), (padding, padding)),
                 mode="reflect")
    ref = jax.lax.conv_general_dilated(
        xp, weight,
        window_strides=(stride, stride),
        padding="VALID",
        rhs_dilation=(dilation, dilation),
        dimension_numbers=("NCHW", "OIHW", "NCHW"))
    assert out.shape == ref.shape == (B, out_channels, H, W)
    np.testing.assert_allclose(np.asarray(out), np.asarray(ref),
                               rtol=2e-2, atol=5e-1)

    print("KERNEL_OK")
</pallas_src>

<mosaic_0001>
module attributes {stable_mosaic.version = 11 : i64} {
  func.func @_soft_hebb_conv_kernel(%arg0: i32, %arg1: memref<2x8x512xbf16, #tpu.memory_space<vmem>>, %arg2: memref<16x200xbf16, #tpu.memory_space<vmem>>, %arg3: memref<2x16x384xf32, #tpu.memory_space<vmem>>, %arg4: memref<200x768xbf16, #tpu.memory_space<vmem>>) attributes {dimension_semantics = [#tpu.dimension_semantics<parallel>], iteration_bounds = array<i64: 1>, scalar_prefetch = 0 : i64, scratch_operands = 1 : i64, tpu.core_type = #tpu.core_type<tc>, window_params = [{transform_indices = @transform_0, window_bounds = array<i64: 2, 8, 512>}, {pipeline_mode = #tpu.pipeline_mode<synchronous>, transform_indices = @transform_1, window_bounds = array<i64: 16, 200>}, {transform_indices = @transform_2, window_bounds = array<i64: 2, 16, 384>}]} {
    %c0 = arith.constant 0 : index
    %c0_0 = arith.constant 0 : index
    %c0_1 = arith.constant 0 : index
    %0 = vector.load %arg1[%c0, %c0_0, %c0_1] : memref<2x8x512xbf16, #tpu.memory_space<vmem>>, vector<1x8x384xbf16>
    %1 = vector.shape_cast %0 : vector<1x8x384xbf16> to vector<8x384xbf16>
    %c0_2 = arith.constant 0 : index
    %c0_3 = arith.constant 0 : index
    %2 = vector.load %arg4[%c0_2, %c0_3] : memref<200x768xbf16, #tpu.memory_space<vmem>>, vector<8x384xbf16>
    tpu.vector_store %arg4[%c0_2, %c0_3], %1 {strides = array<i32>} : memref<200x768xbf16, #tpu.memory_space<vmem>>, vector<8x384xbf16>,
    %c1 = arith.constant 1 : index
    %c0_4 = arith.constant 0 : index
    %c0_5 = arith.constant 0 : index
    %3 = vector.load %arg1[%c1, %c0_4, %c0_5] : memref<2x8x512xbf16, #tpu.memory_space<vmem>>, vector<1x8x384xbf16>
    %4 = vector.shape_cast %3 : vector<1x8x384xbf16> to vector<8x384xbf16>
    %c0_6 = arith.constant 0 : index
    %c384 = arith.constant 384 : index
    %5 = vector.load %arg4[%c0_6, %c384] : memref<200x768xbf16, #tpu.memory_space<vmem>>, vector<8x384xbf16>
    tpu.vector_store %arg4[%c0_6, %c384], %4 {strides = array<i32>} : memref<200x768xbf16, #tpu.memory_space<vmem>>, vector<8x384xbf16>,
    %c0_7 = arith.constant 0 : index
    %c0_8 = arith.constant 0 : index
    %c1_9 = arith.constant 1 : index
    %6 = vector.load %arg1[%c0_7, %c0_8, %c1_9] : memref<2x8x512xbf16, #tpu.memory_space<vmem>>, vector<1x8x384xbf16>
    %7 = vector.shape_cast %6 : vector<1x8x384xbf16> to vector<8x384xbf16>
    %c8 = arith.constant 8 : index
    %c0_10 = arith.constant 0 : index
    %8 = vector.load %arg4[%c8, %c0_10] : memref<200x768xbf16, #tpu.memory_space<vmem>>, vector<8x384xbf16>
    tpu.vector_store %arg4[%c8, %c0_10], %7 {strides = array<i32>} : memref<200x768xbf16, #tpu.memory_space<vmem>>, vector<8x384xbf16>,
    %c1_11 = arith.constant 1 : index
    %c0_12 = arith.constant 0 : index
    %c1_13 = arith.constant 1 : index
    %9 = vector.load %arg1[%c1_11, %c0_12, %c1_13] : memref<2x8x512xbf16, #tpu.memory_space<vmem>>, vector<1x8x384xbf16>
    %10 = vector.shape_cast %9 : vector<1x8x384xbf16> to vector<8x384xbf16>
    %c8_14 = arith.constant 8 : index
    %c384_15 = arith.constant 384 : index
    %11 = vector.load %arg4[%c8_14, %c384_15] : memref<200x768xbf16, #tpu.memory_space<vmem>>, vector<8x384xbf16>
    tpu.vector_store %arg4[%c8_14, %c384_15], %10 {strides = array<i32>} : memref<200x768xbf16, #tpu.memory_space<vmem>>, vector<8x384xbf16>,
    %c0_16 = arith.constant 0 : index
    %c0_17 = arith.constant 0 : index
    %c2 = arith.constant 2 : index
    %12 = vector.load %arg1[%c0_16, %c0_17, %c2] : memref<2x8x512xbf16, #tpu.memory_space<vmem>>, vector<1x8x384xbf16>
    %13 = vector.shape_cast %12 : vector<1x8x384xbf16> to vector<8x384xbf16>
    %c16 = arith.constant 16 : index
    %c0_18 = arith.constant 0 : index
    %14 = vector.load %arg4[%c16, %c0_18] : memref<200x768xbf16, #tpu.memory_space<vmem>>, vector<8x384xbf16>
    tpu.vector_store %arg4[%c16, %c0_18], %13 {strides = array<i32>} : memref<200x768xbf16, #tpu.memory_space<vmem>>, vector<8x384xbf16>,
    %c1_19 = arith.constant 1 : index
    %c0_20 = arith.constant 0 : index
    %c2_21 = arith.constant 2 : index
    %15 = vector.load %arg1[%c1_19, %c0_20, %c2_21] : memref<2x8x512xbf16, #tpu.memory_space<vmem>>, vector<1x8x384xbf16>
    %16 = vector.shape_cast %15 : vector<1x8x384xbf16> to vector<8x384xbf16>
    %c16_22 = arith.constant 16 : index
    %c384_23 = arith.constant 384 : index
    %17 = vector.load %arg4[%c16_22, %c384_23] : memref<200x768xbf16, #tpu.memory_space<vmem>>, vector<8x384xbf16>
    tpu.vector_store %arg4[%c16_22, %c384_23], %16 {strides = array<i32>} : memref<200x768xbf16, #tpu.memory_space<vmem>>, vector<8x384xbf16>,
    %c0_24 = arith.constant 0 : index
    %c0_25 = arith.constant 0 : index
    %c3 = arith.constant 3 : index
    %18 = vector.load %arg1[%c0_24, %c0_25, %c3] : memref<2x8x512xbf16, #tpu.memory_space<vmem>>, vector<1x8x384xbf16>
    %19 = vector.shape_cast %18 : vector<1x8x384xbf16> to vector<8x384xbf16>
    %c24 = arith.constant 24 : index
    %c0_26 = arith.constant 0 : index
    %20 = vector.load %arg4[%c24, %c0_26] : memref<200x768xbf16, #tpu.memory_space<vmem>>, vector<8x384xbf16>
    tpu.vector_store %arg4[%c24, %c0_26], %19 {strides = array<i32>} : memref<200x768xbf16, #tpu.memory_space<vmem>>, vector<8x384xbf16>,
    %c1_27 = arith.constant 1 : index
    %c0_28 = arith.constant 0 : index
    %c3_29 = arith.constant 3 : index
    %21 = vector.load %arg1[%c1_27, %c0_28, %c3_29] : memref<2x8x512xbf16, #tpu.memory_space<vmem>>, vector<1x8x384xbf16>
    %22 = vector.shape_cast %21 : vector<1x8x384xbf16> to vector<8x384xbf16>
    %c24_30 = arith.constant 24 : index
    %c384_31 = arith.constant 384 : index
    %23 = vector.load %arg4[%c24_30, %c384_31] : memref<200x768xbf16, #tpu.memory_space<vmem>>, vector<8x384xbf16>
    tpu.vector_store %arg4[%c24_30, %c384_31], %22 {strides = array<i32>} : memref<200x768xbf16, #tpu.memory_space<vmem>>, vector<8x384xbf16>,
    %c0_32 = arith.constant 0 : index
    %c0_33 = arith.constant 0 : index
    %c4 = arith.constant 4 : index
    %24 = vector.load %arg1[%c0_32, %c0_33, %c4] : memref<2x8x512xbf16, #tpu.memory_space<vmem>>, vector<1x8x384xbf16>
    %25 = vector.shape_cast %24 : vector<1x8x384xbf16> to vector<8x384xbf16>
    %c32 = arith.constant 32 : index
    %c0_34 = arith.constant 0 : index
    %26 = vector.load %arg4[%c32, %c0_34] : memref<200x768xbf16, #tpu.memory_space<vmem>>, vector<8x384xbf16>
    tpu.vector_store %arg4[%c32, %c0_34], %25 {strides = array<i32>} : memref<200x768xbf16, #tpu.memory_space<vmem>>, vector<8x384xbf16>,
    %c1_35 = arith.constant 1 : index
    %c0_36 = arith.constant 0 : index
    %c4_37 = arith.constant 4 : index
    %27 = vector.load %arg1[%c1_35, %c0_36, %c4_37] : memref<2x8x512xbf16, #tpu.memory_space<vmem>>, vector<1x8x384xbf16>
    %28 = vector.shape_cast %27 : vector<1x8x384xbf16> to vector<8x384xbf16>
    %c32_38 = arith.constant 32 : index
    %c384_39 = arith.constant 384 : index
    %29 = vector.load %arg4[%c32_38, %c384_39] : memref<200x768xbf16, #tpu.memory_space<vmem>>, vector<8x384xbf16>
    tpu.vector_store %arg4[%c32_38, %c384_39], %28 {strides = array<i32>} : memref<200x768xbf16, #tpu.memory_space<vmem>>, vector<8x384xbf16>,
    %c0_40 = arith.constant 0 : index
    %c0_41 = arith.constant 0 : index
    %c20 = arith.constant 20 : index
    %30 = vector.load %arg1[%c0_40, %c0_41, %c20] : memref<2x8x512xbf16, #tpu.memory_space<vmem>>, vector<1x8x384xbf16>
    %31 = vector.shape_cast %30 : vector<1x8x384xbf16> to vector<8x384xbf16>
    %c40 = arith.constant 40 : index
    %c0_42 = arith.constant 0 : index
    %32 = vector.load %arg4[%c40, %c0_42] : memref<200x768xbf16, #tpu.memory_space<vmem>>, vector<8x384xbf16>
    tpu.vector_store %arg4[%c40, %c0_42], %31 {strides = array<i32>} : memref<200x768xbf16, #tpu.memory_space<vmem>>, vector<8x384xbf16>,
    %c1_43 = arith.constant 1 : index
    %c0_44 = arith.constant 0 : index
    %c20_45 = arith.constant 20 : index
    %33 = vector.load %arg1[%c1_43, %c0_44, %c20_45] : memref<2x8x512xbf16, #tpu.memory_space<vmem>>, vector<1x8x384xbf16>
    %34 = vector.shape_cast %33 : vector<1x8x384xbf16> to vector<8x384xbf16>
    %c40_46 = arith.constant 40 : index
    %c384_47 = arith.constant 384 : index
    %35 = vector.load %arg4[%c40_46, %c384_47] : memref<200x768xbf16, #tpu.memory_space<vmem>>, vector<8x384xbf16>
    tpu.vector_store %arg4[%c40_46, %c384_47], %34 {strides = array<i32>} : memref<200x768xbf16, #tpu.memory_space<vmem>>, vector<8x384xbf16>,
    %c0_48 = arith.constant 0 : index
    %c0_49 = arith.constant 0 : index
    %c21 = arith.constant 21 : index
    %36 = vector.load %arg1[%c0_48, %c0_49, %c21] : memref<2x8x512xbf16, #tpu.memory_space<vmem>>, vector<1x8x384xbf16>
    %37 = vector.shape_cast %36 : vector<1x8x384xbf16> to vector<8x384xbf16>
    %c48 = arith.constant 48 : index
    %c0_50 = arith.constant 0 : index
    %38 = vector.load %arg4[%c48, %c0_50] : memref<200x768xbf16, #tpu.memory_space<vmem>>, vector<8x384xbf16>
    tpu.vector_store %arg4[%c48, %c0_50], %37 {strides = array<i32>} : memref<200x768xbf16, #tpu.memory_space<vmem>>, vector<8x384xbf16>,
    %c1_51 = arith.constant 1 : index
    %c0_52 = arith.constant 0 : index
    %c21_53 = arith.constant 21 : index
    %39 = vector.load %arg1[%c1_51, %c0_52, %c21_53] : memref<2x8x512xbf16, #tpu.memory_space<vmem>>, vector<1x8x384xbf16>
    %40 = vector.shape_cast %39 : vector<1x8x384xbf16> to vector<8x384xbf16>
    %c48_54 = arith.constant 48 : index
    %c384_55 = arith.constant 384 : index
    %41 = vector.load %arg4[%c48_54, %c384_55] : memref<200x768xbf16, #tpu.memory_space<vmem>>, vector<8x384xbf16>
    tpu.vector_store %arg4[%c48_54, %c384_55], %40 {strides = array<i32>} : memref<200x768xbf16, #tpu.memory_space<vmem>>, vector<8x384xbf16>,
    %c0_56 = arith.constant 0 : index
    %c0_57 = arith.constant 0 : index
    %c22 = arith.constant 22 : index
    %42 = vector.load %arg1[%c0_56, %c0_57, %c22] : memref<2x8x512xbf16, #tpu.memory_space<vmem>>, vector<1x8x384xbf16>
    %43 = vector.shape_cast %42 : vector<1x8x384xbf16> to vector<8x384xbf16>
    %c56 = arith.constant 56 : index
    %c0_58 = arith.constant 0 : index
    %44 = vector.load %arg4[%c56, %c0_58] : memref<200x768xbf16, #tpu.memory_space<vmem>>, vector<8x384xbf16>
    tpu.vector_store %arg4[%c56, %c0_58], %43 {strides = array<i32>} : memref<200x768xbf16, #tpu.memory_space<vmem>>, vector<8x384xbf16>,
    %c1_59 = arith.constant 1 : index
    %c0_60 = arith.constant 0 : index
    %c22_61 = arith.constant 22 : index
    %45 = vector.load %arg1[%c1_59, %c0_60, %c22_61] : memref<2x8x512xbf16, #tpu.memory_space<vmem>>, vector<1x8x384xbf16>
    %46 = vector.shape_cast %45 : vector<1x8x384xbf16> to vector<8x384xbf16>
    %c56_62 = arith.constant 56 : index
    %c384_63 = arith.constant 384 : index
    %47 = vector.load %arg4[%c56_62, %c384_63] : memref<200x768xbf16, #tpu.memory_space<vmem>>, vector<8x384xbf16>
    tpu.vector_store %arg4[%c56_62, %c384_63], %46 {strides = array<i32>} : memref<200x768xbf16, #tpu.memory_space<vmem>>, vector<8x384xbf16>,
    %c0_64 = arith.constant 0 : index
    %c0_65 = arith.constant 0 : index
    %c23 = arith.constant 23 : index
    %48 = vector.load %arg1[%c0_64, %c0_65, %c23] : memref<2x8x512xbf16, #tpu.memory_space<vmem>>, vector<1x8x384xbf16>
    %49 = vector.shape_cast %48 : vector<1x8x384xbf16> to vector<8x384xbf16>
    %c64 = arith.constant 64 : index
    %c0_66 = arith.constant 0 : index
    %50 = vector.load %arg4[%c64, %c0_66] : memref<200x768xbf16, #tpu.memory_space<vmem>>, vector<8x384xbf16>
    tpu.vector_store %arg4[%c64, %c0_66], %49 {strides = array<i32>} : memref<200x768xbf16, #tpu.memory_space<vmem>>, vector<8x384xbf16>,
    %c1_67 = arith.constant 1 : index
    %c0_68 = arith.constant 0 : index
    %c23_69 = arith.constant 23 : index
    %51 = vector.load %arg1[%c1_67, %c0_68, %c23_69] : memref<2x8x512xbf16, #tpu.memory_space<vmem>>, vector<1x8x384xbf16>
    %52 = vector.shape_cast %51 : vector<1x8x384xbf16> to vector<8x384xbf16>
    %c64_70 = arith.constant 64 : index
    %c384_71 = arith.constant 384 : index
    %53 = vector.load %arg4[%c64_70, %c384_71] : memref<200x768xbf16, #tpu.memory_space<vmem>>, vector<8x384xbf16>
    tpu.vector_store %arg4[%c64_70, %c384_71], %52 {strides = array<i32>} : memref<200x768xbf16, #tpu.memory_space<vmem>>, vector<8x384xbf16>,
    %c0_72 = arith.constant 0 : index
    %c0_73 = arith.constant 0 : index
    %c24_74 = arith.constant 24 : index
    %54 = vector.load %arg1[%c0_72, %c0_73, %c24_74] : memref<2x8x512xbf16, #tpu.memory_space<vmem>>, vector<1x8x384xbf16>
    %55 = vector.shape_cast %54 : vector<1x8x384xbf16> to vector<8x384xbf16>
    %c72 = arith.constant 72 : index
    %c0_75 = arith.constant 0 : index
    %56 = vector.load %arg4[%c72, %c0_75] : memref<200x768xbf16, #tpu.memory_space<vmem>>, vector<8x384xbf16>
    tpu.vector_store %arg4[%c72, %c0_75], %55 {strides = array<i32>} : memref<200x768xbf16, #tpu.memory_space<vmem>>, vector<8x384xbf16>,
    %c1_76 = arith.constant 1 : index
    %c0_77 = arith.constant 0 : index
    %c24_78 = arith.constant 24 : index
    %57 = vector.load %arg1[%c1_76, %c0_77, %c24_78] : memref<2x8x512xbf16, #tpu.memory_space<vmem>>, vector<1x8x384xbf16>
    %58 = vector.shape_cast %57 : vector<1x8x384xbf16> to vector<8x384xbf16>
    %c72_79 = arith.constant 72 : index
    %c384_80 = arith.constant 384 : index
    %59 = vector.load %arg4[%c72_79, %c384_80] : memref<200x768xbf16, #tpu.memory_space<vmem>>, vector<8x384xbf16>
    tpu.vector_store %arg4[%c72_79, %c384_80], %58 {strides = array<i32>} : memref<200x768xbf16, #tpu.memory_space<vmem>>, vector<8x384xbf16>,
    %c0_81 = arith.constant 0 : index
    %c0_82 = arith.constant 0 : index
    %c40_83 = arith.constant 40 : index
    %60 = vector.load %arg1[%c0_81, %c0_82, %c40_83] : memref<2x8x512xbf16, #tpu.memory_space<vmem>>, vector<1x8x384xbf16>
    %61 = vector.shape_cast %60 : vector<1x8x384xbf16> to vector<8x384xbf16>
    %c80 = arith.constant 80 : index
    %c0_84 = arith.constant 0 : index
    %62 = vector.load %arg4[%c80, %c0_84] : memref<200x768xbf16, #tpu.memory_space<vmem>>, vector<8x384xbf16>
    tpu.vector_store %arg4[%c80, %c0_84], %61 {strides = array<i32>} : memref<200x768xbf16, #tpu.memory_space<vmem>>, vector<8x384xbf16>,
    %c1_85 = arith.constant 1 : index
    %c0_86 = arith.constant 0 : index
    %c40_87 = arith.constant 40 : index
    %63 = vector.load %arg1[%c1_85, %c0_86, %c40_87] : memref<2x8x512xbf16, #tpu.memory_space<vmem>>, vector<1x8x384xbf16>
    %64 = vector.shape_cast %63 : vector<1x8x384xbf16> to vector<8x384xbf16>
    %c80_88 = arith.constant 80 : index
    %c384_89 = arith.constant 384 : index
    %65 = vector.load %arg4[%c80_88, %c384_89] : memref<200x768xbf16, #tpu.memory_space<vmem>>, vector<8x384xbf16>
    tpu.vector_store %arg4[%c80_88, %c384_89], %64 {strides = array<i32>} : memref<200x768xbf16, #tpu.memory_space<vmem>>, vector<8x384xbf16>,
    %c0_90 = arith.constant 0 : index
    %c0_91 = arith.constant 0 : index
    %c41 = arith.constant 41 : index
    %66 = vector.load %arg1[%c0_90, %c0_91, %c41] : memref<2x8x512xbf16, #tpu.memory_space<vmem>>, vector<1x8x384xbf16>
    %67 = vector.shape_cast %66 : vector<1x8x384xbf16> to vector<8x384xbf16>
    %c88 = arith.constant 88 : index
    %c0_92 = arith.constant 0 : index
    %68 = vector.load %arg4[%c88, %c0_92] : memref<200x768xbf16, #tpu.memory_space<vmem>>, vector<8x384xbf16>
    tpu.vector_store %arg4[%c88, %c0_92], %67 {strides = array<i32>} : memref<200x768xbf16, #tpu.memory_space<vmem>>, vector<8x384xbf16>,
    %c1_93 = arith.constant 1 : index
    %c0_94 = arith.constant 0 : index
    %c41_95 = arith.constant 41 : index
    %69 = vector.load %arg1[%c1_93, %c0_94, %c41_95] : memref<2x8x512xbf16, #tpu.memory_space<vmem>>, vector<1x8x384xbf16>
    %70 = vector.shape_cast %69 : vector<1x8x384xbf16> to vector<8x384xbf16>
    %c88_96 = arith.constant 88 : index
    %c384_97 = arith.constant 384 : index
    %71 = vector.load %arg4[%c88_96, %c384_97] : memref<200x768xbf16, #tpu.memory_space<vmem>>, vector<8x384xbf16>
    tpu.vector_store %arg4[%c88_96, %c384_97], %70 {strides = array<i32>} : memref<200x768xbf16, #tpu.memory_space<vmem>>, vector<8x384xbf16>,
    %c0_98 = arith.constant 0 : index
    %c0_99 = arith.constant 0 : index
    %c42 = arith.constant 42 : index
    %72 = vector.load %arg1[%c0_98, %c0_99, %c42] : memref<2x8x512xbf16, #tpu.memory_space<vmem>>, vector<1x8x384xbf16>
    %73 = vector.shape_cast %72 : vector<1x8x384xbf16> to vector<8x384xbf16>
    %c96 = arith.constant 96 : index
    %c0_100 = arith.constant 0 : index
    %74 = vector.load %arg4[%c96, %c0_100] : memref<200x768xbf16, #tpu.memory_space<vmem>>, vector<8x384xbf16>
    tpu.vector_store %arg4[%c96, %c0_100], %73 {strides = array<i32>} : memref<200x768xbf16, #tpu.memory_space<vmem>>, vector<8x384xbf16>,
    %c1_101 = arith.constant 1 : index
    %c0_102 = arith.constant 0 : index
    %c42_103 = arith.constant 42 : index
    %75 = vector.load %arg1[%c1_101, %c0_102, %c42_103] : memref<2x8x512xbf16, #tpu.memory_space<vmem>>, vector<1x8x384xbf16>
    %76 = vector.shape_cast %75 : vector<1x8x384xbf16> to vector<8x384xbf16>
    %c96_104 = arith.constant 96 : index
    %c384_105 = arith.constant 384 : index
    %77 = vector.load %arg4[%c96_104, %c384_105] : memref<200x768xbf16, #tpu.memory_space<vmem>>, vector<8x384xbf16>
    tpu.vector_store %arg4[%c96_104, %c384_105], %76 {strides = array<i32>} : memref<200x768xbf16, #tpu.memory_space<vmem>>, vector<8x384xbf16>,
    %c0_106 = arith.constant 0 : index
    %c0_107 = arith.constant 0 : index
    %c43 = arith.constant 43 : index
    %78 = vector.load %arg1[%c0_106, %c0_107, %c43] : memref<2x8x512xbf16, #tpu.memory_space<vmem>>, vector<1x8x384xbf16>
    %79 = vector.shape_cast %78 : vector<1x8x384xbf16> to vector<8x384xbf16>
    %c104 = arith.constant 104 : index
    %c0_108 = arith.constant 0 : index
    %80 = vector.load %arg4[%c104, %c0_108] : memref<200x768xbf16, #tpu.memory_space<vmem>>, vector<8x384xbf16>
    tpu.vector_store %arg4[%c104, %c0_108], %79 {strides = array<i32>} : memref<200x768xbf16, #tpu.memory_space<vmem>>, vector<8x384xbf16>,
    %c1_109 = arith.constant 1 : index
    %c0_110 = arith.constant 0 : index
    %c43_111 = arith.constant 43 : index
    %81 = vector.load %arg1[%c1_109, %c0_110, %c43_111] : memref<2x8x512xbf16, #tpu.memory_space<vmem>>, vector<1x8x384xbf16>
    %82 = vector.shape_cast %81 : vector<1x8x384xbf16> to vector<8x384xbf16>
    %c104_112 = arith.constant 104 : index
    %c384_113 = arith.constant 384 : index
    %83 = vector.load %arg4[%c104_112, %c384_113] : memref<200x768xbf16, #tpu.memory_space<vmem>>, vector<8x384xbf16>
    tpu.vector_store %arg4[%c104_112, %c384_113], %82 {strides = array<i32>} : memref<200x768xbf16, #tpu.memory_space<vmem>>, vector<8x384xbf16>,
    %c0_114 = arith.constant 0 : index
    %c0_115 = arith.constant 0 : index
    %c44 = arith.constant 44 : index
    %84 = vector.load %arg1[%c0_114, %c0_115, %c44] : memref<2x8x512xbf16, #tpu.memory_space<vmem>>, vector<1x8x384xbf16>
    %85 = vector.shape_cast %84 : vector<1x8x384xbf16> to vector<8x384xbf16>
    %c112 = arith.constant 112 : index
    %c0_116 = arith.constant 0 : index
    %86 = vector.load %arg4[%c112, %c0_116] : memref<200x768xbf16, #tpu.memory_space<vmem>>, vector<8x384xbf16>
    tpu.vector_store %arg4[%c112, %c0_116], %85 {strides = array<i32>} : memref<200x768xbf16, #tpu.memory_space<vmem>>, vector<8x384xbf16>,
    %c1_117 = arith.constant 1 : index
    %c0_118 = arith.constant 0 : index
    %c44_119 = arith.constant 44 : index
    %87 = vector.load %arg1[%c1_117, %c0_118, %c44_119] : memref<2x8x512xbf16, #tpu.memory_space<vmem>>, vector<1x8x384xbf16>
    %88 = vector.shape_cast %87 : vector<1x8x384xbf16> to vector<8x384xbf16>
    %c112_120 = arith.constant 112 : index
    %c384_121 = arith.constant 384 : index
    %89 = vector.load %arg4[%c112_120, %c384_121] : memref<200x768xbf16, #tpu.memory_space<vmem>>, vector<8x384xbf16>
    tpu.vector_store %arg4[%c112_120, %c384_121], %88 {strides = array<i32>} : memref<200x768xbf16, #tpu.memory_space<vmem>>, vector<8x384xbf16>,
    %c0_122 = arith.constant 0 : index
    %c0_123 = arith.constant 0 : index
    %c60 = arith.constant 60 : index
    %90 = vector.load %arg1[%c0_122, %c0_123, %c60] : memref<2x8x512xbf16, #tpu.memory_space<vmem>>, vector<1x8x384xbf16>
    %91 = vector.shape_cast %90 : vector<1x8x384xbf16> to vector<8x384xbf16>
    %c120 = arith.constant 120 : index
    %c0_124 = arith.constant 0 : index
    %92 = vector.load %arg4[%c120, %c0_124] : memref<200x768xbf16, #tpu.memory_space<vmem>>, vector<8x384xbf16>
    tpu.vector_store %arg4[%c120, %c0_124], %91 {strides = array<i32>} : memref<200x768xbf16, #tpu.memory_space<vmem>>, vector<8x384xbf16>,
    %c1_125 = arith.constant 1 : index
    %c0_126 = arith.constant 0 : index
    %c60_127 = arith.constant 60 : index
    %93 = vector.load %arg1[%c1_125, %c0_126, %c60_127] : memref<2x8x512xbf16, #tpu.memory_space<vmem>>, vector<1x8x384xbf16>
    %94 = vector.shape_cast %93 : vector<1x8x384xbf16> to vector<8x384xbf16>
    %c120_128 = arith.constant 120 : index
    %c384_129 = arith.constant 384 : index
    %95 = vector.load %arg4[%c120_128, %c384_129] : memref<200x768xbf16, #tpu.memory_space<vmem>>, vector<8x384xbf16>
    tpu.vector_store %arg4[%c120_128, %c384_129], %94 {strides = array<i32>} : memref<200x768xbf16, #tpu.memory_space<vmem>>, vector<8x384xbf16>,
    %c0_130 = arith.constant 0 : index
    %c0_131 = arith.constant 0 : index
    %c61 = arith.constant 61 : index
    %96 = vector.load %arg1[%c0_130, %c0_131, %c61] : memref<2x8x512xbf16, #tpu.memory_space<vmem>>, vector<1x8x384xbf16>
    %97 = vector.shape_cast %96 : vector<1x8x384xbf16> to vector<8x384xbf16>
    %c128 = arith.constant 128 : index
    %c0_132 = arith.constant 0 : index
    %98 = vector.load %arg4[%c128, %c0_132] : memref<200x768xbf16, #tpu.memory_space<vmem>>, vector<8x384xbf16>
    tpu.vector_store %arg4[%c128, %c0_132], %97 {strides = array<i32>} : memref<200x768xbf16, #tpu.memory_space<vmem>>, vector<8x384xbf16>,
    %c1_133 = arith.constant 1 : index
    %c0_134 = arith.constant 0 : index
    %c61_135 = arith.constant 61 : index
    %99 = vector.load %arg1[%c1_133, %c0_134, %c61_135] : memref<2x8x512xbf16, #tpu.memory_space<vmem>>, vector<1x8x384xbf16>
    %100 = vector.shape_cast %99 : vector<1x8x384xbf16> to vector<8x384xbf16>
    %c128_136 = arith.constant 128 : index
    %c384_137 = arith.constant 384 : index
    %101 = vector.load %arg4[%c128_136, %c384_137] : memref<200x768xbf16, #tpu.memory_space<vmem>>, vector<8x384xbf16>
    tpu.vector_store %arg4[%c128_136, %c384_137], %100 {strides = array<i32>} : memref<200x768xbf16, #tpu.memory_space<vmem>>, vector<8x384xbf16>,
    %c0_138 = arith.constant 0 : index
    %c0_139 = arith.constant 0 : index
    %c62 = arith.constant 62 : index
    %102 = vector.load %arg1[%c0_138, %c0_139, %c62] : memref<2x8x512xbf16, #tpu.memory_space<vmem>>, vector<1x8x384xbf16>
    %103 = vector.shape_cast %102 : vector<1x8x384xbf16> to vector<8x384xbf16>
    %c136 = arith.constant 136 : index
    %c0_140 = arith.constant 0 : index
    %104 = vector.load %arg4[%c136, %c0_140] : memref<200x768xbf16, #tpu.memory_space<vmem>>, vector<8x384xbf16>
    tpu.vector_store %arg4[%c136, %c0_140], %103 {strides = array<i32>} : memref<200x768xbf16, #tpu.memory_space<vmem>>, vector<8x384xbf16>,
    %c1_141 = arith.constant 1 : index
    %c0_142 = arith.constant 0 : index
    %c62_143 = arith.constant 62 : index
    %105 = vector.load %arg1[%c1_141, %c0_142, %c62_143] : memref<2x8x512xbf16, #tpu.memory_space<vmem>>, vector<1x8x384xbf16>
    %106 = vector.shape_cast %105 : vector<1x8x384xbf16> to vector<8x384xbf16>
    %c136_144 = arith.constant 136 : index
    %c384_145 = arith.constant 384 : index
    %107 = vector.load %arg4[%c136_144, %c384_145] : memref<200x768xbf16, #tpu.memory_space<vmem>>, vector<8x384xbf16>
    tpu.vector_store %arg4[%c136_144, %c384_145], %106 {strides = array<i32>} : memref<200x768xbf16, #tpu.memory_space<vmem>>, vector<8x384xbf16>,
    %c0_146 = arith.constant 0 : index
    %c0_147 = arith.constant 0 : index
    %c63 = arith.constant 63 : index
    %108 = vector.load %arg1[%c0_146, %c0_147, %c63] : memref<2x8x512xbf16, #tpu.memory_space<vmem>>, vector<1x8x384xbf16>
    %109 = vector.shape_cast %108 : vector<1x8x384xbf16> to vector<8x384xbf16>
    %c144 = arith.constant 144 : index
    %c0_148 = arith.constant 0 : index
    %110 = vector.load %arg4[%c144, %c0_148] : memref<200x768xbf16, #tpu.memory_space<vmem>>, vector<8x384xbf16>
    tpu.vector_store %arg4[%c144, %c0_148], %109 {strides = array<i32>} : memref<200x768xbf16, #tpu.memory_space<vmem>>, vector<8x384xbf16>,
    %c1_149 = arith.constant 1 : index
    %c0_150 = arith.constant 0 : index
    %c63_151 = arith.constant 63 : index
    %111 = vector.load %arg1[%c1_149, %c0_150, %c63_151] : memref<2x8x512xbf16, #tpu.memory_space<vmem>>, vector<1x8x384xbf16>
    %112 = vector.shape_cast %111 : vector<1x8x384xbf16> to vector<8x384xbf16>
    %c144_152 = arith.constant 144 : index
    %c384_153 = arith.constant 384 : index
    %113 = vector.load %arg4[%c144_152, %c384_153] : memref<200x768xbf16, #tpu.memory_space<vmem>>, vector<8x384xbf16>
    tpu.vector_store %arg4[%c144_152, %c384_153], %112 {strides = array<i32>} : memref<200x768xbf16, #tpu.memory_space<vmem>>, vector<8x384xbf16>,
    %c0_154 = arith.constant 0 : index
    %c0_155 = arith.constant 0 : index
    %c64_156 = arith.constant 64 : index
    %114 = vector.load %arg1[%c0_154, %c0_155, %c64_156] : memref<2x8x512xbf16, #tpu.memory_space<vmem>>, vector<1x8x384xbf16>
    %115 = vector.shape_cast %114 : vector<1x8x384xbf16> to vector<8x384xbf16>
    %c152 = arith.constant 152 : index
    %c0_157 = arith.constant 0 : index
    %116 = vector.load %arg4[%c152, %c0_157] : memref<200x768xbf16, #tpu.memory_space<vmem>>, vector<8x384xbf16>
    tpu.vector_store %arg4[%c152, %c0_157], %115 {strides = array<i32>} : memref<200x768xbf16, #tpu.memory_space<vmem>>, vector<8x384xbf16>,
    %c1_158 = arith.constant 1 : index
    %c0_159 = arith.constant 0 : index
    %c64_160 = arith.constant 64 : index
    %117 = vector.load %arg1[%c1_158, %c0_159, %c64_160] : memref<2x8x512xbf16, #tpu.memory_space<vmem>>, vector<1x8x384xbf16>
    %118 = vector.shape_cast %117 : vector<1x8x384xbf16> to vector<8x384xbf16>
    %c152_161 = arith.constant 152 : index
    %c384_162 = arith.constant 384 : index
    %119 = vector.load %arg4[%c152_161, %c384_162] : memref<200x768xbf16, #tpu.memory_space<vmem>>, vector<8x384xbf16>
    tpu.vector_store %arg4[%c152_161, %c384_162], %118 {strides = array<i32>} : memref<200x768xbf16, #tpu.memory_space<vmem>>, vector<8x384xbf16>,
    %c0_163 = arith.constant 0 : index
    %c0_164 = arith.constant 0 : index
    %c80_165 = arith.constant 80 : index
    %120 = vector.load %arg1[%c0_163, %c0_164, %c80_165] : memref<2x8x512xbf16, #tpu.memory_space<vmem>>, vector<1x8x384xbf16>
    %121 = vector.shape_cast %120 : vector<1x8x384xbf16> to vector<8x384xbf16>
    %c160 = arith.constant 160 : index
    %c0_166 = arith.constant 0 : index
    %122 = vector.load %arg4[%c160, %c0_166] : memref<200x768xbf16, #tpu.memory_space<vmem>>, vector<8x384xbf16>
    tpu.vector_store %arg4[%c160, %c0_166], %121 {strides = array<i32>} : memref<200x768xbf16, #tpu.memory_space<vmem>>, vector<8x384xbf16>,
    %c1_167 = arith.constant 1 : index
    %c0_168 = arith.constant 0 : index
    %c80_169 = arith.constant 80 : index
    %123 = vector.load %arg1[%c1_167, %c0_168, %c80_169] : memref<2x8x512xbf16, #tpu.memory_space<vmem>>, vector<1x8x384xbf16>
    %124 = vector.shape_cast %123 : vector<1x8x384xbf16> to vector<8x384xbf16>
    %c160_170 = arith.constant 160 : index
    %c384_171 = arith.constant 384 : index
    %125 = vector.load %arg4[%c160_170, %c384_171] : memref<200x768xbf16, #tpu.memory_space<vmem>>, vector<8x384xbf16>
    tpu.vector_store %arg4[%c160_170, %c384_171], %124 {strides = array<i32>} : memref<200x768xbf16, #tpu.memory_space<vmem>>, vector<8x384xbf16>,
    %c0_172 = arith.constant 0 : index
    %c0_173 = arith.constant 0 : index
    %c81 = arith.constant 81 : index
    %126 = vector.load %arg1[%c0_172, %c0_173, %c81] : memref<2x8x512xbf16, #tpu.memory_space<vmem>>, vector<1x8x384xbf16>
    %127 = vector.shape_cast %126 : vector<1x8x384xbf16> to vector<8x384xbf16>
    %c168 = arith.constant 168 : index
    %c0_174 = arith.constant 0 : index
    %128 = vector.load %arg4[%c168, %c0_174] : memref<200x768xbf16, #tpu.memory_space<vmem>>, vector<8x384xbf16>
    tpu.vector_store %arg4[%c168, %c0_174], %127 {strides = array<i32>} : memref<200x768xbf16, #tpu.memory_space<vmem>>, vector<8x384xbf16>,
    %c1_175 = arith.constant 1 : index
    %c0_176 = arith.constant 0 : index
    %c81_177 = arith.constant 81 : index
    %129 = vector.load %arg1[%c1_175, %c0_176, %c81_177] : memref<2x8x512xbf16, #tpu.memory_space<vmem>>, vector<1x8x384xbf16>
    %130 = vector.shape_cast %129 : vector<1x8x384xbf16> to vector<8x384xbf16>
    %c168_178 = arith.constant 168 : index
    %c384_179 = arith.constant 384 : index
    %131 = vector.load %arg4[%c168_178, %c384_179] : memref<200x768xbf16, #tpu.memory_space<vmem>>, vector<8x384xbf16>
    tpu.vector_store %arg4[%c168_178, %c384_179], %130 {strides = array<i32>} : memref<200x768xbf16, #tpu.memory_space<vmem>>, vector<8x384xbf16>,
    %c0_180 = arith.constant 0 : index
    %c0_181 = arith.constant 0 : index
    %c82 = arith.constant 82 : index
    %132 = vector.load %arg1[%c0_180, %c0_181, %c82] : memref<2x8x512xbf16, #tpu.memory_space<vmem>>, vector<1x8x384xbf16>
    %133 = vector.shape_cast %132 : vector<1x8x384xbf16> to vector<8x384xbf16>
    %c176 = arith.constant 176 : index
    %c0_182 = arith.constant 0 : index
    %134 = vector.load %arg4[%c176, %c0_182] : memref<200x768xbf16, #tpu.memory_space<vmem>>, vector<8x384xbf16>
    tpu.vector_store %arg4[%c176, %c0_182], %133 {strides = array<i32>} : memref<200x768xbf16, #tpu.memory_space<vmem>>, vector<8x384xbf16>,
    %c1_183 = arith.constant 1 : index
    %c0_184 = arith.constant 0 : index
    %c82_185 = arith.constant 82 : index
    %135 = vector.load %arg1[%c1_183, %c0_184, %c82_185] : memref<2x8x512xbf16, #tpu.memory_space<vmem>>, vector<1x8x384xbf16>
    %136 = vector.shape_cast %135 : vector<1x8x384xbf16> to vector<8x384xbf16>
    %c176_186 = arith.constant 176 : index
    %c384_187 = arith.constant 384 : index
    %137 = vector.load %arg4[%c176_186, %c384_187] : memref<200x768xbf16, #tpu.memory_space<vmem>>, vector<8x384xbf16>
    tpu.vector_store %arg4[%c176_186, %c384_187], %136 {strides = array<i32>} : memref<200x768xbf16, #tpu.memory_space<vmem>>, vector<8x384xbf16>,
    %c0_188 = arith.constant 0 : index
    %c0_189 = arith.constant 0 : index
    %c83 = arith.constant 83 : index
    %138 = vector.load %arg1[%c0_188, %c0_189, %c83] : memref<2x8x512xbf16, #tpu.memory_space<vmem>>, vector<1x8x384xbf16>
    %139 = vector.shape_cast %138 : vector<1x8x384xbf16> to vector<8x384xbf16>
    %c184 = arith.constant 184 : index
    %c0_190 = arith.constant 0 : index
    %140 = vector.load %arg4[%c184, %c0_190] : memref<200x768xbf16, #tpu.memory_space<vmem>>, vector<8x384xbf16>
    tpu.vector_store %arg4[%c184, %c0_190], %139 {strides = array<i32>} : memref<200x768xbf16, #tpu.memory_space<vmem>>, vector<8x384xbf16>,
    %c1_191 = arith.constant 1 : index
    %c0_192 = arith.constant 0 : index
    %c83_193 = arith.constant 83 : index
    %141 = vector.load %arg1[%c1_191, %c0_192, %c83_193] : memref<2x8x512xbf16, #tpu.memory_space<vmem>>, vector<1x8x384xbf16>
    %142 = vector.shape_cast %141 : vector<1x8x384xbf16> to vector<8x384xbf16>
    %c184_194 = arith.constant 184 : index
    %c384_195 = arith.constant 384 : index
    %143 = vector.load %arg4[%c184_194, %c384_195] : memref<200x768xbf16, #tpu.memory_space<vmem>>, vector<8x384xbf16>
    tpu.vector_store %arg4[%c184_194, %c384_195], %142 {strides = array<i32>} : memref<200x768xbf16, #tpu.memory_space<vmem>>, vector<8x384xbf16>,
    %c0_196 = arith.constant 0 : index
    %c0_197 = arith.constant 0 : index
    %c84 = arith.constant 84 : index
    %144 = vector.load %arg1[%c0_196, %c0_197, %c84] : memref<2x8x512xbf16, #tpu.memory_space<vmem>>, vector<1x8x384xbf16>
    %145 = vector.shape_cast %144 : vector<1x8x384xbf16> to vector<8x384xbf16>
    %c192 = arith.constant 192 : index
    %c0_198 = arith.constant 0 : index
    %146 = vector.load %arg4[%c192, %c0_198] : memref<200x768xbf16, #tpu.memory_space<vmem>>, vector<8x384xbf16>
    tpu.vector_store %arg4[%c192, %c0_198], %145 {strides = array<i32>} : memref<200x768xbf16, #tpu.memory_space<vmem>>, vector<8x384xbf16>,
    %c1_199 = arith.constant 1 : index
    %c0_200 = arith.constant 0 : index
    %c84_201 = arith.constant 84 : index
    %147 = vector.load %arg1[%c1_199, %c0_200, %c84_201] : memref<2x8x512xbf16, #tpu.memory_space<vmem>>, vector<1x8x384xbf16>
    %148 = vector.shape_cast %147 : vector<1x8x384xbf16> to vector<8x384xbf16>
    %c192_202 = arith.constant 192 : index
    %c384_203 = arith.constant 384 : index
    %149 = vector.load %arg4[%c192_202, %c384_203] : memref<200x768xbf16, #tpu.memory_space<vmem>>, vector<8x384xbf16>
    tpu.vector_store %arg4[%c192_202, %c384_203], %148 {strides = array<i32>} : memref<200x768xbf16, #tpu.memory_space<vmem>>, vector<8x384xbf16>,
    %c0_204 = arith.constant 0 : index
    %c0_205 = arith.constant 0 : index
    %150 = vector.load %arg2[%c0_204, %c0_205] : memref<16x200xbf16, #tpu.memory_space<vmem>>, vector<16x200xbf16>
    %c0_206 = arith.constant 0 : index
    %c0_207 = arith.constant 0 : index
    %151 = vector.load %arg4[%c0_206, %c0_207] : memref<200x768xbf16, #tpu.memory_space<vmem>>, vector<200x768xbf16>
    %cst = arith.constant dense<0.000000e+00> : vector<16x768xf32>
    %152 = tpu.matmul %150, %151, %cst {dimension_numbers = #tpu.dot_dimension_numbers<[1], [0], [0], [1], [0, 0, 1, 1], [], []>} : vector<16x200xbf16>, vector<200x768xbf16>, vector<16x768xf32> -> vector<16x768xf32>
    %153 = vector.extract_strided_slice %152 {offsets = [0, 0], sizes = [16, 384], strides = [1, 1]} : vector<16x768xf32> to vector<16x384xf32>
    %c0_208 = arith.constant 0 : index
    %c0_209 = arith.constant 0 : index
    %c0_210 = arith.constant 0 : index
    %154 = vector.load %arg3[%c0_208, %c0_209, %c0_210] : memref<2x16x384xf32, #tpu.memory_space<vmem>>, vector<1x16x384xf32>
    %155 = vector.shape_cast %154 : vector<1x16x384xf32> to vector<16x384xf32>
    %156 = vector.shape_cast %153 : vector<16x384xf32> to vector<1x16x384xf32>
    tpu.vector_store %arg3[%c0_208, %c0_209, %c0_210], %156 {strides = array<i32>} : memref<2x16x384xf32, #tpu.memory_space<vmem>>, vector<1x16x384xf32>,
    %157 = vector.extract_strided_slice %152 {offsets = [0, 384], sizes = [16, 384], strides = [1, 1]} : vector<16x768xf32> to vector<16x384xf32>
    %c1_211 = arith.constant 1 : index
    %c0_212 = arith.constant 0 : index
    %c0_213 = arith.constant 0 : index
    %158 = vector.load %arg3[%c1_211, %c0_212, %c0_213] : memref<2x16x384xf32, #tpu.memory_space<vmem>>, vector<1x16x384xf32>
    %159 = vector.shape_cast %158 : vector<1x16x384xf32> to vector<16x384xf32>
    %160 = vector.shape_cast %157 : vector<16x384xf32> to vector<1x16x384xf32>
    tpu.vector_store %arg3[%c1_211, %c0_212, %c0_213], %160 {strides = array<i32>} : memref<2x16x384xf32, #tpu.memory_space<vmem>>, vector<1x16x384xf32>,
    return
  }
  func.func @transform_0(%arg0: i32) -> (i32, i32, i32) {
    %c0_i32 = arith.constant 0 : i32
    %c0_i32_0 = arith.constant 0 : i32
    %c0_i32_1 = arith.constant 0 : i32
    return %arg0, %c0_i32, %c0_i32_0 : i32, i32, i32
  }
  func.func @transform_1(%arg0: i32) -> (i32, i32) {
    %c0_i32 = arith.constant 0 : i32
    %c0_i32_0 = arith.constant 0 : i32
    %c0_i32_1 = arith.constant 0 : i32
    return %c0_i32, %c0_i32_0 : i32, i32
  }
  func.func @transform_2(%arg0: i32) -> (i32, i32, i32) {
    %c0_i32 = arith.constant 0 : i32
    %c0_i32_0 = arith.constant 0 : i32
    %c0_i32_1 = arith.constant 0 : i32
    return %arg0, %c0_i32, %c0_i32_0 : i32, i32, i32
  }
}

</mosaic_0001>

<llo_original>
// kernel: soft_hebb_conv2d_forward.1
$region0: #{soft_hebb_conv2d_forward.1}
  #allocation0 [shape = 'u32[]', space=smem, size = 0x4, offset = 0x4, fixed_abs, tag = 'smem constant byte address 0x4 - core index']
  #allocation1 [shape = 'u32[72,128]{1,0:T(1,128)}', space=vmem, size = 0x9000, scoped, tag = 'internal scratch']
  #allocation2 [shape = 'bf16[200,768]{1,0:T(8,128)(2,1)}', space=vmem, size = 0x4b000, scoped, tag = 'scratch operand']
  %s0 = inlined_call_operand.vmem [shape: bf16[2,8,512], index: 0, kind: input, shape index: {}]
  %s1 = inlined_call_operand.vmem [shape: bf16[16,200], index: 1, kind: input, shape index: {}]
  %s2 = inlined_call_operand.vmem [shape: f32[2,16,384], index: 2, kind: output, shape index: {}]
  %s3 = sld [smem:[#allocation0]]
  $region18: #{soft_hebb_conv2d_forward.1} parent=0
    _
  %s5 = ssub.s32 1, %s3
  %s6 = scalar_select 0, %s5, %s3
  // Predicated region
  $region2: #{soft_hebb_conv2d_forward.1} parent=0 // pred_check
    _
  $region3: #{soft_hebb_conv2d_forward.1} parent=0 // pred_check_branch
    %8 = sbr.rel (0) target = $region5
  $region4: #{soft_hebb_conv2d_forward.1} parent=0 // pred_region
    _
  $region5: #{soft_hebb_conv2d_forward.1} parent=0 // pred_fallthru
    _
  // Predicated region
  $region6: #{soft_hebb_conv2d_forward.1} parent=0 // pred_check
    _
  $region7: #{soft_hebb_conv2d_forward.1} parent=0 // pred_check_branch
    %10 = sbr.rel (0) target = $region9
  $region8: #{soft_hebb_conv2d_forward.1} parent=0 // pred_region
    _
  $region9: #{soft_hebb_conv2d_forward.1} parent=0 // pred_fallthru
    _
  %v12 = vld [vmem:[%s0] sm:$0xff]
  %v13 = vld [vmem:[%s0 + $0x8] sm:$0xf]
  %14 = vst [vmem:[#allocation2] sm:$0xff] %v12
  %15 = vst [vmem:[#allocation2 + $0x8] sm:$0xf] %v13
  %s16 = scalar_lea.vmem %s0, 16
  %v17 = vld [vmem:[%s16] sm:$0xff]
  %v18 = vld [vmem:[%s16 + $0x8] sm:$0xf]
  %19 = vst [vmem:[#allocation2 + $0xc] sm:$0xff] %v17
  %20 = vst [vmem:[#allocation2 + $0x14] sm:$0xf] %v18
  %v21 = vld [vmem:[%s0] sm:$0xff]
  %v22 = vld [vmem:[%s0 + $0x8] sm:$0xff]
  %25 = vrot.lane.b32.xlu0 %v21, 127
  %v26 = vpop.permute.xlu0 %25
  %27 = vrot.lane.b32.xlu0 %v22, 127
  %v28 = vpop.permute.xlu0 %27
  %v29 = vrot.slane %v26, 4
  %v30 = vrot.slane %v28, 4
  %vm31 = vcmask 1043456
  %v32 = vsel %vm31, %v29, %v30
  %vm33 = vcmask 1039360
  %v34 = vsel %vm33, %v26, %v32
  %v35 = vsel %vm33, %v28, %v30
  %38 = vst [vmem:[#allocation2 + $0x18] sm:$0xff] %v34
  %39 = vst [vmem:[#allocation2 + $0x20] sm:$0xf] %v35
  %v40 = vld [vmem:[%s16] sm:$0xff]
  %v41 = vld [vmem:[%s16 + $0x8] sm:$0xff]
  %44 = vrot.lane.b32.xlu0 %v40, 127
  %v45 = vpop.permute.xlu0 %44
  %46 = vrot.lane.b32.xlu0 %v41, 127
  %v47 = vpop.permute.xlu0 %46
  %v48 = vrot.slane %v45, 4
  %v49 = vrot.slane %v47, 4
  %v50 = vsel %vm31, %v48, %v49
  %v51 = vsel %vm33, %v45, %v50
  %v52 = vsel %vm33, %v47, %v49
  %55 = vst [vmem:[#allocation2 + $0x24] sm:$0xff] %v51
  %56 = vst [vmem:[#allocation2 + $0x2c] sm:$0xf] %v52
  %v57 = vld [vmem:[%s0] sm:$0xff]
  %v58 = vld [vmem:[%s0 + $0x8] sm:$0xff]
  %61 = vrot.lane.b32.xlu0 %v57, 126
  %v62 = vpop.permute.xlu0 %61
  %63 = vrot.lane.b32.xlu0 %v58, 126
  %v64 = vpop.permute.xlu0 %63
  %v65 = vrot.slane %v62, 4
  %v66 = vrot.slane %v64, 4
  %v67 = vsel %vm31, %v65, %v66
  %vm68 = vcmask 1031168
  %v69 = vsel %vm68, %v62, %v67
  %v70 = vsel %vm68, %v64, %v66
  %73 = vst [vmem:[#allocation2 + $0x30] sm:$0xff] %v69
  %74 = vst [vmem:[#allocation2 + $0x38] sm:$0xf] %v70
  %v75 = vld [vmem:[%s16] sm:$0xff]
  %v76 = vld [vmem:[%s16 + $0x8] sm:$0xff]
  %79 = vrot.lane.b32.xlu0 %v75, 126
  %v80 = vpop.permute.xlu0 %79
  %81 = vrot.lane.b32.xlu0 %v76, 126
  %v82 = vpop.permute.xlu0 %81
  %v83 = vrot.slane %v80, 4
  %v84 = vrot.slane %v82, 4
  %v85 = vsel %vm31, %v83, %v84
  %v86 = vsel %vm68, %v80, %v85
  %v87 = vsel %vm68, %v82, %v84
  %90 = vst [vmem:[#allocation2 + $0x3c] sm:$0xff] %v86
  %91 = vst [vmem:[#allocation2 + $0x44] sm:$0xf] %v87
  %v92 = vld [vmem:[%s0] sm:$0xff]
  %v93 = vld [vmem:[%s0 + $0x8] sm:$0xff]
  %96 = vrot.lane.b32.xlu0 %v92, 125
  %v97 = vpop.permute.xlu0 %96
  %98 = vrot.lane.b32.xlu0 %v93, 125
  %v99 = vpop.permute.xlu0 %98
  %v100 = vrot.slane %v97, 4
  %v101 = vrot.slane %v99, 4
  %v102 = vsel %vm31, %v100, %v101
  %vm103 = vcmask 1022976
  %v104 = vsel %vm103, %v97, %v102
  %v105 = vsel %vm103, %v99, %v101
  %108 = vst [vmem:[#allocation2 + $0x48] sm:$0xff] %v104
  %109 = vst [vmem:[#allocation2 + $0x50] sm:$0xf] %v105
  %v110 = vld [vmem:[%s16] sm:$0xff]
  %v111 = vld [vmem:[%s16 + $0x8] sm:$0xff]
  %114 = vrot.lane.b32.xlu0 %v110, 125
  %v115 = vpop.permute.xlu0 %114
  %116 = vrot.lane.b32.xlu0 %v111, 125
  %v117 = vpop.permute.xlu0 %116
  %v118 = vrot.slane %v115, 4
  %v119 = vrot.slane %v117, 4
  %v120 = vsel %vm31, %v118, %v119
  %v121 = vsel %vm103, %v115, %v120
  %v122 = vsel %vm103, %v117, %v119
  %125 = vst [vmem:[#allocation2 + $0x54] sm:$0xff] %v121
  %126 = vst [vmem:[#allocation2 + $0x5c] sm:$0xf] %v122
  %v127 = vld [vmem:[%s0] sm:$0xff]
  %v128 = vld [vmem:[%s0 + $0x8] sm:$0xff]
  %131 = vrot.lane.b32.xlu0 %v127, 124
  %v132 = vpop.permute.xlu0 %131
  %133 = vrot.lane.b32.xlu0 %v128, 124
  %v134 = vpop.permute.xlu0 %133
  %v135 = vrot.slane %v132, 4
  %v136 = vrot.slane %v134, 4
  %v137 = vsel %vm31, %v135, %v136
  %vm138 = vcmask 1014784
  %v139 = vsel %vm138, %v132, %v137
  %v140 = vsel %vm138, %v134, %v136
  %143 = vst [vmem:[#allocation2 + $0x60] sm:$0xff] %v139
  %144 = vst [vmem:[#allocation2 + $0x68] sm:$0xf] %v140
  %v145 = vld [vmem:[%s16] sm:$0xff]
  %v146 = vld [vmem:[%s16 + $0x8] sm:$0xff]
  %149 = vrot.lane.b32.xlu0 %v145, 124
  %v150 = vpop.permute.xlu0 %149
  %151 = vrot.lane.b32.xlu0 %v146, 124
  %v152 = vpop.permute.xlu0 %151
  %v153 = vrot.slane %v150, 4
  %v154 = vrot.slane %v152, 4
  %v155 = vsel %vm31, %v153, %v154
  %v156 = vsel %vm138, %v150, %v155
  %v157 = vsel %vm138, %v152, %v154
  %160 = vst [vmem:[#allocation2 + $0x6c] sm:$0xff] %v156
  %161 = vst [vmem:[#allocation2 + $0x74] sm:$0xf] %v157
  %v162 = vld [vmem:[%s0] sm:$0xff]
  %v163 = vld [vmem:[%s0 + $0x8] sm:$0xff]
  %166 = vrot.lane.b32.xlu0 %v162, 108
  %v167 = vpop.permute.xlu0 %166
  %168 = vrot.lane.b32.xlu0 %v163, 108
  %v169 = vpop.permute.xlu0 %168
  %v170 = vrot.slane %v167, 4
  %v171 = vrot.slane %v169, 4
  %v172 = vsel %vm31, %v170, %v171
  %vm173 = vcmask 883712
  %v174 = vsel %vm173, %v167, %v172
  %v175 = vsel %vm173, %v169, %v171
  %178 = vst [vmem:[#allocation2 + $0x78] sm:$0xff] %v174
  %179 = vst [vmem:[#allocation2 + $0x80] sm:$0xf] %v175
  %v180 = vld [vmem:[%s16] sm:$0xff]
  %v181 = vld [vmem:[%s16 + $0x8] sm:$0xff]
  %184 = vrot.lane.b32.xlu0 %v180, 108
  %v185 = vpop.permute.xlu0 %184
  %186 = vrot.lane.b32.xlu0 %v181, 108
  %v187 = vpop.permute.xlu0 %186
  %v188 = vrot.slane %v185, 4
  %v189 = vrot.slane %v187, 4
  %v190 = vsel %vm31, %v188, %v189
  %v191 = vsel %vm173, %v185, %v190
  %v192 = vsel %vm173, %v187, %v189
  %195 = vst [vmem:[#allocation2 + $0x84] sm:$0xff] %v191
  %196 = vst [vmem:[#allocation2 + $0x8c] sm:$0xf] %v192
  %v197 = vld [vmem:[%s0] sm:$0xff]
  %v198 = vld [vmem:[%s0 + $0x8] sm:$0xff]
  %201 = vrot.lane.b32.xlu0 %v197, 107
  %v202 = vpop.permute.xlu0 %201
  %203 = vrot.lane.b32.xlu0 %v198, 107
  %v204 = vpop.permute.xlu0 %203
  %v205 = vrot.slane %v202, 4
  %v206 = vrot.slane %v204, 4
  %v207 = vsel %vm31, %v205, %v206
  %vm208 = vcmask 875520
  %v209 = vsel %vm208, %v202, %v207
  %v210 = vsel %vm208, %v204, %v206
  %213 = vst [vmem:[#allocation2 + $0x90] sm:$0xff] %v209
  %214 = vst [vmem:[#allocation2 + $0x98] sm:$0xf] %v210
  %v215 = vld [vmem:[%s16] sm:$0xff]
  %v216 = vld [vmem:[%s16 + $0x8] sm:$0xff]
  %219 = vrot.lane.b32.xlu0 %v215, 107
  %v220 = vpop.permute.xlu0 %219
  %221 = vrot.lane.b32.xlu0 %v216, 107
  %v222 = vpop.permute.xlu0 %221
  %v223 = vrot.slane %v220, 4
  %v224 = vrot.slane %v222, 4
  %v225 = vsel %vm31, %v223, %v224
  %v226 = vsel %vm208, %v220, %v225
  %v227 = vsel %vm208, %v222, %v224
  %230 = vst [vmem:[#allocation2 + $0x9c] sm:$0xff] %v226
  %231 = vst [vmem:[#allocation2 + $0xa4] sm:$0xf] %v227
  %v232 = vld [vmem:[%s0] sm:$0xff]
  %v233 = vld [vmem:[%s0 + $0x8] sm:$0xff]
  %236 = vrot.lane.b32.xlu0 %v232, 106
  %v237 = vpop.permute.xlu0 %236
  %238 = vrot.lane.b32.xlu0 %v233, 106
  %v239 = vpop.permute.xlu0 %238
  %v240 = vrot.slane %v237, 4
  %v241 = vrot.slane %v239, 4
  %v242 = vsel %vm31, %v240, %v241
  %vm243 = vcmask 867328
  %v244 = vsel %vm243, %v237, %v242
  %v245 = vsel %vm243, %v239, %v241
  %248 = vst [vmem:[#allocation2 + $0xa8] sm:$0xff] %v244
  %249 = vst [vmem:[#allocation2 + $0xb0] sm:$0xf] %v245
  %v250 = vld [vmem:[%s16] sm:$0xff]
  %v251 = vld [vmem:[%s16 + $0x8] sm:$0xff]
  %254 = vrot.lane.b32.xlu0 %v250, 106
  %v255 = vpop.permute.xlu0 %254
  %256 = vrot.lane.b32.xlu0 %v251, 106
  %v257 = vpop.permute.xlu0 %256
  %v258 = vrot.slane %v255, 4
  %v259 = vrot.slane %v257, 4
  %v260 = vsel %vm31, %v258, %v259
  %v261 = vsel %vm243, %v255, %v260
  %v262 = vsel %vm243, %v257, %v259
  %265 = vst [vmem:[#allocation2 + $0xb4] sm:$0xff] %v261
  %266 = vst [vmem:[#allocation2 + $0xbc] sm:$0xf] %v262
  %v267 = vld [vmem:[%s0] sm:$0xff]
  %v268 = vld [vmem:[%s0 + $0x8] sm:$0xff]
  %271 = vrot.lane.b32.xlu0 %v267, 105
  %v272 = vpop.permute.xlu0 %271
  %273 = vrot.lane.b32.xlu0 %v268, 105
  %v274 = vpop.permute.xlu0 %273
  %v275 = vrot.slane %v272, 4
  %v276 = vrot.slane %v274, 4
  %v277 = vsel %vm31, %v275, %v276
  %vm278 = vcmask 859136
  %v279 = vsel %vm278, %v272, %v277
  %v280 = vsel %vm278, %v274, %v276
  %283 = vst [vmem:[#allocation2 + $0xc0] sm:$0xff] %v279
  %284 = vst [vmem:[#allocation2 + $0xc8] sm:$0xf] %v280
  %v285 = vld [vmem:[%s16] sm:$0xff]
  %v286 = vld [vmem:[%s16 + $0x8] sm:$0xff]
  %289 = vrot.lane.b32.xlu0 %v285, 105
  %v290 = vpop.permute.xlu0 %289
  %291 = vrot.lane.b32.xlu0 %v286, 105
  %v292 = vpop.permute.xlu0 %291
  %v293 = vrot.slane %v290, 4
  %v294 = vrot.slane %v292, 4
  %v295 = vsel %vm31, %v293, %v294
  %v296 = vsel %vm278, %v290, %v295
  %v297 = vsel %vm278, %v292, %v294
  %300 = vst [vmem:[#allocation2 + $0xcc] sm:$0xff] %v296
  %301 = vst [vmem:[#allocation2 + $0xd4] sm:$0xf] %v297
  %v302 = vld [vmem:[%s0] sm:$0xff]
  %v303 = vld [vmem:[%s0 + $0x8] sm:$0xff]
  %306 = vrot.lane.b32.xlu0 %v302, 104
  %v307 = vpop.permute.xlu0 %306
  %308 = vrot.lane.b32.xlu0 %v303, 104
  %v309 = vpop.permute.xlu0 %308
  %v310 = vrot.slane %v307, 4
  %v311 = vrot.slane %v309, 4
  %v312 = vsel %vm31, %v310, %v311
  %vm313 = vcmask 850944
  %v314 = vsel %vm313, %v307, %v312
  %v315 = vsel %vm313, %v309, %v311
  %318 = vst [vmem:[#allocation2 + $0xd8] sm:$0xff] %v314
  %319 = vst [vmem:[#allocation2 + $0xe0] sm:$0xf] %v315
  %v320 = vld [vmem:[%s16] sm:$0xff]
  %v321 = vld [vmem:[%s16 + $0x8] sm:$0xff]
  %324 = vrot.lane.b32.xlu0 %v320, 104
  %v325 = vpop.permute.xlu0 %324
  %326 = vrot.lane.b32.xlu0 %v321, 104
  %v327 = vpop.permute.xlu0 %326
  %v328 = vrot.slane %v325, 4
  %v329 = vrot.slane %v327, 4
  %v330 = vsel %vm31, %v328, %v329
  %v331 = vsel %vm313, %v325, %v330
  %v332 = vsel %vm313, %v327, %v329
  %335 = vst [vmem:[#allocation2 + $0xe4] sm:$0xff] %v331
  %336 = vst [vmem:[#allocation2 + $0xec] sm:$0xf] %v332
  %v337 = vld [vmem:[%s0] sm:$0xff]
  %v338 = vld [vmem:[%s0 + $0x8] sm:$0xff]
  %341 = vrot.lane.b32.xlu0 %v337, 88
  %v342 = vpop.permute.xlu0 %341
  %343 = vrot.lane.b32.xlu0 %v338, 88
  %v344 = vpop.permute.xlu0 %343
  %v345 = vrot.slane %v342, 4
  %v346 = vrot.slane %v344, 4
  %v347 = vsel %vm31, %v345, %v346
  %vm348 = vcmask 719872
  %v349 = vsel %vm348, %v342, %v347
  %v350 = vsel %vm348, %v344, %v346
  %353 = vst [vmem:[#allocation2 + $0xf0] sm:$0xff] %v349
  %354 = vst [vmem:[#allocation2 + $0xf8] sm:$0xf] %v350
  %v355 = vld [vmem:[%s16] sm:$0xff]
  %v356 = vld [vmem:[%s16 + $0x8] sm:$0xff]
  %359 = vrot.lane.b32.xlu0 %v355, 88
  %v360 = vpop.permute.xlu0 %359
  %361 = vrot.lane.b32.xlu0 %v356, 88
  %v362 = vpop.permute.xlu0 %361
  %v363 = vrot.slane %v360, 4
  %v364 = vrot.slane %v362, 4
  %v365 = vsel %vm31, %v363, %v364
  %v366 = vsel %vm348, %v360, %v365
  %v367 = vsel %vm348, %v362, %v364
  %370 = vst [vmem:[#allocation2 + $0xfc] sm:$0xff] %v366
  %371 = vst [vmem:[#allocation2 + $0x104] sm:$0xf] %v367
  %v372 = vld [vmem:[%s0] sm:$0xff]
  %v373 = vld [vmem:[%s0 + $0x8] sm:$0xff]
  %376 = vrot.lane.b32.xlu0 %v372, 87
  %v377 = vpop.permute.xlu0 %376
  %378 = vrot.lane.b32.xlu0 %v373, 87
  %v379 = vpop.permute.xlu0 %378
  %v380 = vrot.slane %v377, 4
  %v381 = vrot.slane %v379, 4
  %v382 = vsel %vm31, %v380, %v381
  %vm383 = vcmask 711680
  %v384 = vsel %vm383, %v377, %v382
  %v385 = vsel %vm383, %v379, %v381
  %388 = vst [vmem:[#allocation2 + $0x108] sm:$0xff] %v384
  %389 = vst [vmem:[#allocation2 + $0x110] sm:$0xf] %v385
  %v390 = vld [vmem:[%s16] sm:$0xff]
  %v391 = vld [vmem:[%s16 + $0x8] sm:$0xff]
  %394 = vrot.lane.b32.xlu0 %v390, 87
  %v395 = vpop.permute.xlu0 %394
  %396 = vrot.lane.b32.xlu0 %v391, 87
  %v397 = vpop.permute.xlu0 %396
  %v398 = vrot.slane %v395, 4
  %v399 = vrot.slane %v397, 4
  %v400 = vsel %vm31, %v398, %v399
  %v401 = vsel %vm383, %v395, %v400
  %v402 = vsel %vm383, %v397, %v399
  %405 = vst [vmem:[#allocation2 + $0x114] sm:$0xff] %v401
  %406 = vst [vmem:[#allocation2 + $0x11c] sm:$0xf] %v402
  %v407 = vld [vmem:[%s0] sm:$0xff]
  %v408 = vld [vmem:[%s0 + $0x8] sm:$0xff]
  %411 = vrot.lane.b32.xlu0 %v407, 86
  %v412 = vpop.permute.xlu0 %411
  %413 = vrot.lane.b32.xlu0 %v408, 86
  %v414 = vpop.permute.xlu0 %413
  %v415 = vrot.slane %v412, 4
  %v416 = vrot.slane %v414, 4
  %v417 = vsel %vm31, %v415, %v416
  %vm418 = vcmask 703488
  %v419 = vsel %vm418, %v412, %v417
  %v420 = vsel %vm418, %v414, %v416
  %423 = vst [vmem:[#allocation2 + $0x120] sm:$0xff] %v419
  %424 = vst [vmem:[#allocation2 + $0x128] sm:$0xf] %v420
  %v425 = vld [vmem:[%s16] sm:$0xff]
  %v426 = vld [vmem:[%s16 + $0x8] sm:$0xff]
  %429 = vrot.lane.b32.xlu0 %v425, 86
  %v430 = vpop.permute.xlu0 %429
  %431 = vrot.lane.b32.xlu0 %v426, 86
  %v432 = vpop.permute.xlu0 %431
  %v433 = vrot.slane %v430, 4
  %v434 = vrot.slane %v432, 4
  %v435 = vsel %vm31, %v433, %v434
  %v436 = vsel %vm418, %v430, %v435
  %v437 = vsel %vm418, %v432, %v434
  %440 = vst [vmem:[#allocation2 + $0x12c] sm:$0xff] %v436
  %441 = vst [vmem:[#allocation2 + $0x134] sm:$0xf] %v437
  %v442 = vld [vmem:[%s0] sm:$0xff]
  %v443 = vld [vmem:[%s0 + $0x8] sm:$0xff]
  %446 = vrot.lane.b32.xlu0 %v442, 85
  %v447 = vpop.permute.xlu0 %446
  %448 = vrot.lane.b32.xlu0 %v443, 85
  %v449 = vpop.permute.xlu0 %448
  %v450 = vrot.slane %v447, 4
  %v451 = vrot.slane %v449, 4
  %v452 = vsel %vm31, %v450, %v451
  %vm453 = vcmask 695296
  %v454 = vsel %vm453, %v447, %v452
  %v455 = vsel %vm453, %v449, %v451
  %458 = vst [vmem:[#allocation2 + $0x138] sm:$0xff] %v454
  %459 = vst [vmem:[#allocation2 + $0x140] sm:$0xf] %v455
  %v460 = vld [vmem:[%s16] sm:$0xff]
  %v461 = vld [vmem:[%s16 + $0x8] sm:$0xff]
  %464 = vrot.lane.b32.xlu0 %v460, 85
  %v465 = vpop.permute.xlu0 %464
  %466 = vrot.lane.b32.xlu0 %v461, 85
  %v467 = vpop.permute.xlu0 %466
  %v468 = vrot.slane %v465, 4
  %v469 = vrot.slane %v467, 4
  %v470 = vsel %vm31, %v468, %v469
  %v471 = vsel %vm453, %v465, %v470
  %v472 = vsel %vm453, %v467, %v469
  %475 = vst [vmem:[#allocation2 + $0x144] sm:$0xff] %v471
  %476 = vst [vmem:[#allocation2 + $0x14c] sm:$0xf] %v472
  %v477 = vld [vmem:[%s0] sm:$0xff]
  %v478 = vld [vmem:[%s0 + $0x8] sm:$0xff]
  %481 = vrot.lane.b32.xlu0 %v477, 84
  %v482 = vpop.permute.xlu0 %481
  %483 = vrot.lane.b32.xlu0 %v478, 84
  %v484 = vpop.permute.xlu0 %483
  %v485 = vrot.slane %v482, 4
  %v486 = vrot.slane %v484, 4
  %v487 = vsel %vm31, %v485, %v486
  %vm488 = vcmask 687104
  %v489 = vsel %vm488, %v482, %v487
  %v490 = vsel %vm488, %v484, %v486
  %493 = vst [vmem:[#allocation2 + $0x150] sm:$0xff] %v489
  %494 = vst [vmem:[#allocation2 + $0x158] sm:$0xf] %v490
  %v495 = vld [vmem:[%s16] sm:$0xff]
  %v496 = vld [vmem:[%s16 + $0x8] sm:$0xff]
  %499 = vrot.lane.b32.xlu0 %v495, 84
  %v500 = vpop.permute.xlu0 %499
  %501 = vrot.lane.b32.xlu0 %v496, 84
  %v502 = vpop.permute.xlu0 %501
  %v503 = vrot.slane %v500, 4
  %v504 = vrot.slane %v502, 4
  %v505 = vsel %vm31, %v503, %v504
  %v506 = vsel %vm488, %v500, %v505
  %v507 = vsel %vm488, %v502, %v504
  %510 = vst [vmem:[#allocation2 + $0x15c] sm:$0xff] %v506
  %511 = vst [vmem:[#allocation2 + $0x164] sm:$0xf] %v507
  %v512 = vld [vmem:[%s0] sm:$0xff]
  %v513 = vld [vmem:[%s0 + $0x8] sm:$0xff]
  %516 = vrot.lane.b32.xlu0 %v512, 68
  %v517 = vpop.permute.xlu0 %516
  %518 = vrot.lane.b32.xlu0 %v513, 68
  %v519 = vpop.permute.xlu0 %518
  %v520 = vrot.slane %v517, 4
  %v521 = vrot.slane %v519, 4
  %v522 = vsel %vm31, %v520, %v521
  %vm523 = vcmask 556032
  %v524 = vsel %vm523, %v517, %v522
  %v525 = vsel %vm523, %v519, %v521
  %528 = vst [vmem:[#allocation2 + $0x168] sm:$0xff] %v524
  %529 = vst [vmem:[#allocation2 + $0x170] sm:$0xf] %v525
  %v530 = vld [vmem:[%s16] sm:$0xff]
  %v531 = vld [vmem:[%s16 + $0x8] sm:$0xff]
  %534 = vrot.lane.b32.xlu0 %v530, 68
  %v535 = vpop.permute.xlu0 %534
  %536 = vrot.lane.b32.xlu0 %v531, 68
  %v537 = vpop.permute.xlu0 %536
  %v538 = vrot.slane %v535, 4
  %v539 = vrot.slane %v537, 4
  %v540 = vsel %vm31, %v538, %v539
  %v541 = vsel %vm523, %v535, %v540
  %v542 = vsel %vm523, %v537, %v539
  %545 = vst [vmem:[#allocation2 + $0x174] sm:$0xff] %v541
  %546 = vst [vmem:[#allocation2 + $0x17c] sm:$0xf] %v542
  %v547 = vld [vmem:[%s0] sm:$0xff]
  %v548 = vld [vmem:[%s0 + $0x8] sm:$0xff]
  %551 = vrot.lane.b32.xlu0 %v547, 67
  %v552 = vpop.permute.xlu0 %551
  %553 = vrot.lane.b32.xlu0 %v548, 67
  %v554 = vpop.permute.xlu0 %553
  %v555 = vrot.slane %v552, 4
  %v556 = vrot.slane %v554, 4
  %v557 = vsel %vm31, %v555, %v556
  %vm558 = vcmask 547840
  %v559 = vsel %vm558, %v552, %v557
  %v560 = vsel %vm558, %v554, %v556
  %563 = vst [vmem:[#allocation2 + $0x180] sm:$0xff] %v559
  %564 = vst [vmem:[#allocation2 + $0x188] sm:$0xf] %v560
  %v565 = vld [vmem:[%s16] sm:$0xff]
  %v566 = vld [vmem:[%s16 + $0x8] sm:$0xff]
  %569 = vrot.lane.b32.xlu0 %v565, 67
  %v570 = vpop.permute.xlu0 %569
  %571 = vrot.lane.b32.xlu0 %v566, 67
  %v572 = vpop.permute.xlu0 %571
  %v573 = vrot.slane %v570, 4
  %v574 = vrot.slane %v572, 4
  %v575 = vsel %vm31, %v573, %v574
  %v576 = vsel %vm558, %v570, %v575
  %v577 = vsel %vm558, %v572, %v574
  %580 = vst [vmem:[#allocation2 + $0x18c] sm:$0xff] %v576
  %581 = vst [vmem:[#allocation2 + $0x194] sm:$0xf] %v577
  %v582 = vld [vmem:[%s0] sm:$0xff]
  %v583 = vld [vmem:[%s0 + $0x8] sm:$0xff]
  %586 = vrot.lane.b32.xlu0 %v582, 66
  %v587 = vpop.permute.xlu0 %586
  %588 = vrot.lane.b32.xlu0 %v583, 66
  %v589 = vpop.permute.xlu0 %588
  %v590 = vrot.slane %v587, 4
  %v591 = vrot.slane %v589, 4
  %v592 = vsel %vm31, %v590, %v591
  %vm593 = vcmask 539648
  %v594 = vsel %vm593, %v587, %v592
  %v595 = vsel %vm593, %v589, %v591
  %598 = vst [vmem:[#allocation2 + $0x198] sm:$0xff] %v594
  %599 = vst [vmem:[#allocation2 + $0x1a0] sm:$0xf] %v595
  %v600 = vld [vmem:[%s16] sm:$0xff]
  %v601 = vld [vmem:[%s16 + $0x8] sm:$0xff]
  %604 = vrot.lane.b32.xlu0 %v600, 66
  %v605 = vpop.permute.xlu0 %604
  %606 = vrot.lane.b32.xlu0 %v601, 66
  %v607 = vpop.permute.xlu0 %606
  %v608 = vrot.slane %v605, 4
  %v609 = vrot.slane %v607, 4
  %v610 = vsel %vm31, %v608, %v609
  %v611 = vsel %vm593, %v605, %v610
  %v612 = vsel %vm593, %v607, %v609
  %615 = vst [vmem:[#allocation2 + $0x1a4] sm:$0xff] %v611
  %616 = vst [vmem:[#allocation2 + $0x1ac] sm:$0xf] %v612
  %v617 = vld [vmem:[%s0] sm:$0xff]
  %v618 = vld [vmem:[%s0 + $0x8] sm:$0xff]
  %621 = vrot.lane.b32.xlu0 %v617, 65
  %v622 = vpop.permute.xlu0 %621
  %623 = vrot.lane.b32.xlu0 %v618, 65
  %v624 = vpop.permute.xlu0 %623
  %v625 = vrot.slane %v622, 4
  %v626 = vrot.slane %v624, 4
  %v627 = vsel %vm31, %v625, %v626
  %vm628 = vcmask 531456
  %v629 = vsel %vm628, %v622, %v627
  %v630 = vsel %vm628, %v624, %v626
  %633 = vst [vmem:[#allocation2 + $0x1b0] sm:$0xff] %v629
  %634 = vst [vmem:[#allocation2 + $0x1b8] sm:$0xf] %v630
  %v635 = vld [vmem:[%s16] sm:$0xff]
  %v636 = vld [vmem:[%s16 + $0x8] sm:$0xff]
  %639 = vrot.lane.b32.xlu0 %v635, 65
  %v640 = vpop.permute.xlu0 %639
  %641 = vrot.lane.b32.xlu0 %v636, 65
  %v642 = vpop.permute.xlu0 %641
  %v643 = vrot.slane %v640, 4
  %v644 = vrot.slane %v642, 4
  %v645 = vsel %vm31, %v643, %v644
  %v646 = vsel %vm628, %v640, %v645
  %v647 = vsel %vm628, %v642, %v644
  %650 = vst [vmem:[#allocation2 + $0x1bc] sm:$0xff] %v646
  %651 = vst [vmem:[#allocation2 + $0x1c4] sm:$0xf] %v647
  %v652 = vld [vmem:[%s0] sm:$0xff]
  %v653 = vld [vmem:[%s0 + $0x8] sm:$0xff]
  %656 = vrot.lane.b32.xlu0 %v652, 64
  %v657 = vpop.permute.xlu0 %656
  %658 = vrot.lane.b32.xlu0 %v653, 64
  %v659 = vpop.permute.xlu0 %658
  %v660 = vrot.slane %v657, 4
  %v661 = vrot.slane %v659, 4
  %v662 = vsel %vm31, %v660, %v661
  %vm663 = vcmask 523264
  %v664 = vsel %vm663, %v657, %v662
  %v665 = vsel %vm663, %v659, %v661
  %668 = vst [vmem:[#allocation2 + $0x1c8] sm:$0xff] %v664
  %669 = vst [vmem:[#allocation2 + $0x1d0] sm:$0xf] %v665
  %v670 = vld [vmem:[%s16] sm:$0xff]
  %v671 = vld [vmem:[%s16 + $0x8] sm:$0xff]
  %674 = vrot.lane.b32.xlu0 %v670, 64
  %v675 = vpop.permute.xlu0 %674
  %676 = vrot.lane.b32.xlu0 %v671, 64
  %v677 = vpop.permute.xlu0 %676
  %v678 = vrot.slane %v675, 4
  %v679 = vrot.slane %v677, 4
  %v680 = vsel %vm31, %v678, %v679
  %v681 = vsel %vm663, %v675, %v680
  %v682 = vsel %vm663, %v677, %v679
  %685 = vst [vmem:[#allocation2 + $0x1d4] sm:$0xff] %v681
  %686 = vst [vmem:[#allocation2 + $0x1dc] sm:$0xf] %v682
  %v687 = vld [vmem:[%s0] sm:$0xff]
  %v688 = vld [vmem:[%s0 + $0x8] sm:$0xff]
  %691 = vrot.lane.b32.xlu0 %v687, 48
  %v692 = vpop.permute.xlu0 %691
  %693 = vrot.lane.b32.xlu0 %v688, 48
  %v694 = vpop.permute.xlu0 %693
  %v695 = vrot.slane %v692, 4
  %v696 = vrot.slane %v694, 4
  %v697 = vsel %vm31, %v695, %v696
  %vm698 = vcmask 392192
  %v699 = vsel %vm698, %v692, %v697
  %v700 = vsel %vm698, %v694, %v696
  %703 = vst [vmem:[#allocation2 + $0x1e0] sm:$0xff] %v699
  %704 = vst [vmem:[#allocation2 + $0x1e8] sm:$0xf] %v700
  %v705 = vld [vmem:[%s16] sm:$0xff]
  %v706 = vld [vmem:[%s16 + $0x8] sm:$0xff]
  %709 = vrot.lane.b32.xlu0 %v705, 48
  %v710 = vpop.permute.xlu0 %709
  %711 = vrot.lane.b32.xlu0 %v706, 48
  %v712 = vpop.permute.xlu0 %711
  %v713 = vrot.slane %v710, 4
  %v714 = vrot.slane %v712, 4
  %v715 = vsel %vm31, %v713, %v714
  %v716 = vsel %vm698, %v710, %v715
  %v717 = vsel %vm698, %v712, %v714
  %720 = vst [vmem:[#allocation2 + $0x1ec] sm:$0xff] %v716
  %721 = vst [vmem:[#allocation2 + $0x1f4] sm:$0xf] %v717
  %v722 = vld [vmem:[%s0] sm:$0xff]
  %v723 = vld [vmem:[%s0 + $0x8] sm:$0xff]
  %726 = vrot.lane.b32.xlu0 %v722, 47
  %v727 = vpop.permute.xlu0 %726
  %728 = vrot.lane.b32.xlu0 %v723, 47
  %v729 = vpop.permute.xlu0 %728
  %v730 = vrot.slane %v727, 4
  %v731 = vrot.slane %v729, 4
  %v732 = vsel %vm31, %v730, %v731
  %vm733 = vcmask 384000
  %v734 = vsel %vm733, %v727, %v732
  %v735 = vsel %vm733, %v729, %v731
  %738 = vst [vmem:[#allocation2 + $0x1f8] sm:$0xff] %v734
  %739 = vst [vmem:[#allocation2 + $0x200] sm:$0xf] %v735
  %v740 = vld [vmem:[%s16] sm:$0xff]
  %v741 = vld [vmem:[%s16 + $0x8] sm:$0xff]
  %744 = vrot.lane.b32.xlu0 %v740, 47
  %v745 = vpop.permute.xlu0 %744
  %746 = vrot.lane.b32.xlu0 %v741, 47
  %v747 = vpop.permute.xlu0 %746
  %v748 = vrot.slane %v745, 4
  %v749 = vrot.slane %v747, 4
  %v750 = vsel %vm31, %v748, %v749
  %v751 = vsel %vm733, %v745, %v750
  %v752 = vsel %vm733, %v747, %v749
  %755 = vst [vmem:[#allocation2 + $0x204] sm:$0xff] %v751
  %756 = vst [vmem:[#allocation2 + $0x20c] sm:$0xf] %v752
  %v757 = vld [vmem:[%s0] sm:$0xff]
  %v758 = vld [vmem:[%s0 + $0x8] sm:$0xff]
  %761 = vrot.lane.b32.xlu0 %v757, 46
  %v762 = vpop.permute.xlu0 %761
  %763 = vrot.lane.b32.xlu0 %v758, 46
  %v764 = vpop.permute.xlu0 %763
  %v765 = vrot.slane %v762, 4
  %v766 = vrot.slane %v764, 4
  %v767 = vsel %vm31, %v765, %v766
  %vm768 = vcmask 375808
  %v769 = vsel %vm768, %v762, %v767
  %v770 = vsel %vm768, %v764, %v766
  %773 = vst [vmem:[#allocation2 + $0x210] sm:$0xff] %v769
  %774 = vst [vmem:[#allocation2 + $0x218] sm:$0xf] %v770
  %v775 = vld [vmem:[%s16] sm:$0xff]
  %v776 = vld [vmem:[%s16 + $0x8] sm:$0xff]
  %779 = vrot.lane.b32.xlu0 %v775, 46
  %v780 = vpop.permute.xlu0 %779
  %781 = vrot.lane.b32.xlu0 %v776, 46
  %v782 = vpop.permute.xlu0 %781
  %v783 = vrot.slane %v780, 4
  %v784 = vrot.slane %v782, 4
  %v785 = vsel %vm31, %v783, %v784
  %v786 = vsel %vm768, %v780, %v785
  %v787 = vsel %vm768, %v782, %v784
  %790 = vst [vmem:[#allocation2 + $0x21c] sm:$0xff] %v786
  %791 = vst [vmem:[#allocation2 + $0x224] sm:$0xf] %v787
  %v792 = vld [vmem:[%s0] sm:$0xff]
  %v793 = vld [vmem:[%s0 + $0x8] sm:$0xff]
  %796 = vrot.lane.b32.xlu0 %v792, 45
  %v797 = vpop.permute.xlu0 %796
  %798 = vrot.lane.b32.xlu0 %v793, 45
  %v799 = vpop.permute.xlu0 %798
  %v800 = vrot.slane %v797, 4
  %v801 = vrot.slane %v799, 4
  %v802 = vsel %vm31, %v800, %v801
  %vm803 = vcmask 367616
  %v804 = vsel %vm803, %v797, %v802
  %v805 = vsel %vm803, %v799, %v801
  %808 = vst [vmem:[#allocation2 + $0x228] sm:$0xff] %v804
  %809 = vst [vmem:[#allocation2 + $0x230] sm:$0xf] %v805
  %v810 = vld [vmem:[%s16] sm:$0xff]
  %v811 = vld [vmem:[%s16 + $0x8] sm:$0xff]
  %814 = vrot.lane.b32.xlu0 %v810, 45
  %v815 = vpop.permute.xlu0 %814
  %816 = vrot.lane.b32.xlu0 %v811, 45
  %v817 = vpop.permute.xlu0 %816
  %v818 = vrot.slane %v815, 4
  %v819 = vrot.slane %v817, 4
  %v820 = vsel %vm31, %v818, %v819
  %v821 = vsel %vm803, %v815, %v820
  %v822 = vsel %vm803, %v817, %v819
  %825 = vst [vmem:[#allocation2 + $0x234] sm:$0xff] %v821
  %826 = vst [vmem:[#allocation2 + $0x23c] sm:$0xf] %v822
  %v827 = vld [vmem:[%s0] sm:$0xff]
  %v828 = vld [vmem:[%s0 + $0x8] sm:$0xff]
  %831 = vrot.lane.b32.xlu0 %v827, 44
  %v832 = vpop.permute.xlu0 %831
  %833 = vrot.lane.b32.xlu0 %v828, 44
  %v834 = vpop.permute.xlu0 %833
  %v835 = vrot.slane %v832, 4
  %v836 = vrot.slane %v834, 4
  %v837 = vsel %vm31, %v835, %v836
  %vm838 = vcmask 359424
  %v839 = vsel %vm838, %v832, %v837
  %v840 = vsel %vm838, %v834, %v836
  %843 = vst [vmem:[#allocation2 + $0x240] sm:$0xff] %v839
  %844 = vst [vmem:[#allocation2 + $0x248] sm:$0xf] %v840
  %v845 = vld [vmem:[%s16] sm:$0xff]
  %v846 = vld [vmem:[%s16 + $0x8] sm:$0xff]
  %849 = vrot.lane.b32.xlu0 %v845, 44
  %v850 = vpop.permute.xlu0 %849
  %851 = vrot.lane.b32.xlu0 %v846, 44
  %v852 = vpop.permute.xlu0 %851
  %v853 = vrot.slane %v850, 4
  %v854 = vrot.slane %v852, 4
  %v855 = vsel %vm31, %v853, %v854
  %v856 = vsel %vm838, %v850, %v855
  %v857 = vsel %vm838, %v852, %v854
  %860 = vst [vmem:[#allocation2 + $0x24c] sm:$0xff] %v856
  %861 = vst [vmem:[#allocation2 + $0x254] sm:$0xf] %v857
  %v862 = vld [vmem:[%s1] sm:$0xff]
  %v863 = vld [vmem:[%s1 + $0x8] sm:$0xff]
  %v864 = vld [vmem:[#allocation2] sm:$0xff]
  %v865 = vld [vmem:[#allocation2 + $0x8] sm:$0xff]
  %v866 = vld [vmem:[#allocation2 + $0x10] sm:$0xff]
  %v867 = vld [vmem:[#allocation2 + $0x18] sm:$0xff]
  %v868 = vld [vmem:[#allocation2 + $0x20] sm:$0xff]
  %v869 = vld [vmem:[#allocation2 + $0x28] sm:$0xff]
  %v870 = vld [vmem:[#allocation2 + $0x30] sm:$0xff]
  %v871 = vld [vmem:[#allocation2 + $0x38] sm:$0xff]
  %v872 = vld [vmem:[#allocation2 + $0x40] sm:$0xff]
  %v873 = vld [vmem:[#allocation2 + $0x48] sm:$0xff]
  %v874 = vld [vmem:[#allocation2 + $0x50] sm:$0xff]
  %v875 = vld [vmem:[#allocation2 + $0x58] sm:$0xff]
  %v876 = vld [vmem:[#allocation2 + $0x60] sm:$0xff]
  %v877 = vld [vmem:[#allocation2 + $0x68] sm:$0xff]
  %v878 = vld [vmem:[#allocation2 + $0x70] sm:$0xff]
  %v879 = vld [vmem:[#allocation2 + $0x78] sm:$0xff]
  %v880 = vld [vmem:[#allocation2 + $0x80] sm:$0xff]
  %v881 = vld [vmem:[#allocation2 + $0x88] sm:$0xff]
  %v882 = vld [vmem:[#allocation2 + $0x90] sm:$0xff]
  %v883 = vld [vmem:[#allocation2 + $0x98] sm:$0xff]
  %v884 = vld [vmem:[#allocation2 + $0xa0] sm:$0xff]
  %v885 = vld [vmem:[#allocation2 + $0xa8] sm:$0xff]
  %v886 = vld [vmem:[#allocation2 + $0xb0] sm:$0xff]
  %v887 = vld [vmem:[#allocation2 + $0xb8] sm:$0xff]
  %v888 = vld [vmem:[#allocation2 + $0xc0] sm:$0xff]
  %v889 = vld [vmem:[#allocation2 + $0xc8] sm:$0xff]
  %v890 = vld [vmem:[#allocation2 + $0xd0] sm:$0xff]
  %v891 = vld [vmem:[#allocation2 + $0xd8] sm:$0xff]
  %v892 = vld [vmem:[#allocation2 + $0xe0] sm:$0xff]
  %v893 = vld [vmem:[#allocation2 + $0xe8] sm:$0xff]
  %v894 = vld [vmem:[#allocation2 + $0xf0] sm:$0xff]
  %v895 = vld [vmem:[#allocation2 + $0xf8] sm:$0xff]
  %v896 = vld [vmem:[#allocation2 + $0x100] sm:$0xff]
  %v897 = vld [vmem:[#allocation2 + $0x108] sm:$0xff]
  %v898 = vld [vmem:[#allocation2 + $0x110] sm:$0xff]
  %v899 = vld [vmem:[#allocation2 + $0x118] sm:$0xff]
  %v900 = vld [vmem:[#allocation2 + $0x120] sm:$0xff]
  %v901 = vld [vmem:[#allocation2 + $0x128] sm:$0xff]
  %v902 = vld [vmem:[#allocation2 + $0x130] sm:$0xff]
  %v903 = vld [vmem:[#allocation2 + $0x138] sm:$0xff]
  %v904 = vld [vmem:[#allocation2 + $0x140] sm:$0xff]
  %v905 = vld [vmem:[#allocation2 + $0x148] sm:$0xff]
  %v906 = vld [vmem:[#allocation2 + $0x150] sm:$0xff]
  %v907 = vld [vmem:[#allocation2 + $0x158] sm:$0xff]
  %v908 = vld [vmem:[#allocation2 + $0x160] sm:$0xff]
  %v909 = vld [vmem:[#allocation2 + $0x168] sm:$0xff]
  %v910 = vld [vmem:[#allocation2 + $0x170] sm:$0xff]
  %v911 = vld [vmem:[#allocation2 + $0x178] sm:$0xff]
  %v912 = vld [vmem:[#allocation2 + $0x180] sm:$0xff]
  %v913 = vld [vmem:[#allocation2 + $0x188] sm:$0xff]
  %v914 = vld [vmem:[#allocation2 + $0x190] sm:$0xff]
  %v915 = vld [vmem:[#allocation2 + $0x198] sm:$0xff]
  %v916 = vld [vmem:[#allocation2 + $0x1a0] sm:$0xff]
  %v917 = vld [vmem:[#allocation2 + $0x1a8] sm:$0xff]
  %v918 = vld [vmem:[#allocation2 + $0x1b0] sm:$0xff]
  %v919 = vld [vmem:[#allocation2 + $0x1b8] sm:$0xff]
  %v920 = vld [vmem:[#allocation2 + $0x1c0] sm:$0xff]
  %v921 = vld [vmem:[#allocation2 + $0x1c8] sm:$0xff]
  %v922 = vld [vmem:[#allocation2 + $0x1d0] sm:$0xff]
  %v923 = vld [vmem:[#allocation2 + $0x1d8] sm:$0xff]
  %v924 = vld [vmem:[#allocation2 + $0x1e0] sm:$0xff]
  %v925 = vld [vmem:[#allocation2 + $0x1e8] sm:$0xff]
  %v926 = vld [vmem:[#allocation2 + $0x1f0] sm:$0xff]
  %v927 = vld [vmem:[#allocation2 + $0x1f8] sm:$0xff]
  %v928 = vld [vmem:[#allocation2 + $0x200] sm:$0xff]
  %v929 = vld [vmem:[#allocation2 + $0x208] sm:$0xff]
  %v930 = vld [vmem:[#allocation2 + $0x210] sm:$0xff]
  %v931 = vld [vmem:[#allocation2 + $0x218] sm:$0xff]
  %v932 = vld [vmem:[#allocation2 + $0x220] sm:$0xff]
  %v933 = vld [vmem:[#allocation2 + $0x228] sm:$0xff]
  %v934 = vld [vmem:[#allocation2 + $0x230] sm:$0xff]
  %v935 = vld [vmem:[#allocation2 + $0x238] sm:$0xff]
  %v936 = vld [vmem:[#allocation2 + $0x240] sm:$0xff]
  %v937 = vld [vmem:[#allocation2 + $0x248] sm:$0xff]
  %v938 = vld [vmem:[#allocation2 + $0x250] sm:$0xff]
  %v941 = vunpack.c.l.b16 %v862
  %v942 = vunpack.c.h.b16 %v862
  %v943 = vunpack.c.l.b16 %v863
  %v944 = vunpack.c.h.b16 %v863
  %v945 = vpack.c.b16 %v943, %v941
  %v946 = vpack.c.b16 %v944, %v942
  %v1023 = vunpack.c.l.b16 %v864
  %v1024 = vunpack.c.h.b16 %v864
  %v1025 = vunpack.c.l.b16 %v865
  %v1026 = vunpack.c.h.b16 %v865
  %v1027 = vunpack.c.l.b16 %v866
  %v1028 = vunpack.c.h.b16 %v866
  %v1029 = vunpack.c.l.b16 %v867
  %v1030 = vunpack.c.h.b16 %v867
  %v1031 = vunpack.c.l.b16 %v868
  %v1032 = vunpack.c.h.b16 %v868
  %v1033 = vunpack.c.l.b16 %v869
  %v1034 = vunpack.c.h.b16 %v869
  %v1035 = vunpack.c.l.b16 %v870
  %v1036 = vunpack.c.h.b16 %v870
  %v1037 = vunpack.c.l.b16 %v871
  %v1038 = vunpack.c.h.b16 %v871
  %v1039 = vunpack.c.l.b16 %v872
  %v1040 = vunpack.c.h.b16 %v872
  %v1041 = vunpack.c.l.b16 %v873
  %v1042 = vunpack.c.h.b16 %v873
  %v1043 = vunpack.c.l.b16 %v874
  %v1044 = vunpack.c.h.b16 %v874
  %v1045 = vunpack.c.l.b16 %v875
  %v1046 = vunpack.c.h.b16 %v875
  %v1047 = vunpack.c.l.b16 %v876
  %v1048 = vunpack.c.h.b16 %v876
  %v1049 = vunpack.c.l.b16 %v877
  %v1050 = vunpack.c.h.b16 %v877
  %v1051 = vunpack.c.l.b16 %v878
  %v1052 = vunpack.c.h.b16 %v878
  %v1053 = vunpack.c.l.b16 %v879
  %v1054 = vunpack.c.h.b16 %v879
  %v1055 = vunpack.c.l.b16 %v880
  %v1056 = vunpack.c.h.b16 %v880
  %v1057 = vunpack.c.l.b16 %v881
  %v1058 = vunpack.c.h.b16 %v881
  %v1059 = vunpack.c.l.b16 %v882
  %v1060 = vunpack.c.h.b16 %v882
  %v1061 = vunpack.c.l.b16 %v883
  %v1062 = vunpack.c.h.b16 %v883
  %v1063 = vunpack.c.l.b16 %v884
  %v1064 = vunpack.c.h.b16 %v884
  %v1065 = vunpack.c.l.b16 %v885
  %v1066 = vunpack.c.h.b16 %v885
  %v1067 = vunpack.c.l.b16 %v886
  %v1068 = vunpack.c.h.b16 %v886
  %v1069 = vunpack.c.l.b16 %v887
  %v1070 = vunpack.c.h.b16 %v887
  %v1071 = vunpack.c.l.b16 %v888
  %v1072 = vunpack.c.h.b16 %v888
  %v1073 = vunpack.c.l.b16 %v889
  %v1074 = vunpack.c.h.b16 %v889
  %v1075 = vunpack.c.l.b16 %v890
  %v1076 = vunpack.c.h.b16 %v890
  %v1077 = vunpack.c.l.b16 %v891
  %v1078 = vunpack.c.h.b16 %v891
  %v1079 = vunpack.c.l.b16 %v892
  %v1080 = vunpack.c.h.b16 %v892
  %v1081 = vunpack.c.l.b16 %v893
  %v1082 = vunpack.c.h.b16 %v893
  %v1083 = vunpack.c.l.b16 %v894
  %v1084 = vunpack.c.h.b16 %v894
  %v1085 = vunpack.c.l.b16 %v895
  %v1086 = vunpack.c.h.b16 %v895
  %v1087 = vunpack.c.l.b16 %v896
  %v1088 = vunpack.c.h.b16 %v896
  %v1089 = vunpack.c.l.b16 %v897
  %v1090 = vunpack.c.h.b16 %v897
  %v1091 = vunpack.c.l.b16 %v898
  %v1092 = vunpack.c.h.b16 %v898
  %v1093 = vunpack.c.l.b16 %v899
  %v1094 = vunpack.c.h.b16 %v899
  %v1095 = vunpack.c.l.b16 %v900
  %v1096 = vunpack.c.h.b16 %v900
  %v1097 = vunpack.c.l.b16 %v901
  %v1098 = vunpack.c.h.b16 %v901
  %v1099 = vunpack.c.l.b16 %v902
  %v1100 = vunpack.c.h.b16 %v902
  %v1101 = vunpack.c.l.b16 %v903
  %v1102 = vunpack.c.h.b16 %v903
  %v1103 = vunpack.c.l.b16 %v904
  %v1104 = vunpack.c.h.b16 %v904
  %v1105 = vunpack.c.l.b16 %v905
  %v1106 = vunpack.c.h.b16 %v905
  %v1107 = vunpack.c.l.b16 %v906
  %v1108 = vunpack.c.h.b16 %v906
  %v1109 = vunpack.c.l.b16 %v907
  %v1110 = vunpack.c.h.b16 %v907
  %v1111 = vunpack.c.l.b16 %v908
  %v1112 = vunpack.c.h.b16 %v908
  %v1113 = vunpack.c.l.b16 %v909
  %v1114 = vunpack.c.h.b16 %v909
  %v1115 = vunpack.c.l.b16 %v910
  %v1116 = vunpack.c.h.b16 %v910
  %v1117 = vunpack.c.l.b16 %v911
  %v1118 = vunpack.c.h.b16 %v911
  %v1119 = vunpack.c.l.b16 %v912
  %v1120 = vunpack.c.h.b16 %v912
  %v1121 = vunpack.c.l.b16 %v913
  %v1122 = vunpack.c.h.b16 %v913
  %v1123 = vunpack.c.l.b16 %v914
  %v1124 = vunpack.c.h.b16 %v914
  %v1125 = vunpack.c.l.b16 %v915
  %v1126 = vunpack.c.h.b16 %v915
  %v1127 = vunpack.c.l.b16 %v916
  %v1128 = vunpack.c.h.b16 %v916
  %v1129 = vunpack.c.l.b16 %v917
  %v1130 = vunpack.c.h.b16 %v917
  %v1131 = vunpack.c.l.b16 %v918
  %v1132 = vunpack.c.h.b16 %v918
  %v1133 = vunpack.c.l.b16 %v919
  %v1134 = vunpack.c.h.b16 %v919
  %v1135 = vunpack.c.l.b16 %v920
  %v1136 = vunpack.c.h.b16 %v920
  %v1137 = vunpack.c.l.b16 %v921
  %v1138 = vunpack.c.h.b16 %v921
  %v1139 = vunpack.c.l.b16 %v922
  %v1140 = vunpack.c.h.b16 %v922
  %v1141 = vunpack.c.l.b16 %v923
  %v1142 = vunpack.c.h.b16 %v923
  %v1143 = vunpack.c.l.b16 %v924
  %v1144 = vunpack.c.h.b16 %v924
  %v1145 = vunpack.c.l.b16 %v925
  %v1146 = vunpack.c.h.b16 %v925
  %v1147 = vunpack.c.l.b16 %v926
  %v1148 = vunpack.c.h.b16 %v926
  %v1149 = vunpack.c.l.b16 %v927
  %v1150 = vunpack.c.h.b16 %v927
  %v1151 = vunpack.c.l.b16 %v928
  %v1152 = vunpack.c.h.b16 %v928
  %v1153 = vunpack.c.l.b16 %v929
  %v1154 = vunpack.c.h.b16 %v929
  %v1155 = vunpack.c.l.b16 %v930
  %v1156 = vunpack.c.h.b16 %v930
  %v1157 = vunpack.c.l.b16 %v931
  %v1158 = vunpack.c.h.b16 %v931
  %v1159 = vunpack.c.l.b16 %v932
  %v1160 = vunpack.c.h.b16 %v932
  %v1161 = vunpack.c.l.b16 %v933
  %v1162 = vunpack.c.h.b16 %v933
  %v1163 = vunpack.c.l.b16 %v934
  %v1164 = vunpack.c.h.b16 %v934
  %v1165 = vunpack.c.l.b16 %v935
  %v1166 = vunpack.c.h.b16 %v935
  %v1167 = vunpack.c.l.b16 %v936
  %v1168 = vunpack.c.h.b16 %v936
  %v1169 = vunpack.c.l.b16 %v937
  %v1170 = vunpack.c.h.b16 %v937
  %v1171 = vunpack.c.l.b16 %v938
  %v1172 = vunpack.c.h.b16 %v938
  %v1173 = vpack.c.b16 %v1029, %v1023
  %v1174 = vpack.c.b16 %v1030, %v1024
  %v1175 = vpack.c.b16 %v1031, %v1025
  %v1176 = vpack.c.b16 %v1032, %v1026
  %v1177 = vpack.c.b16 %v1033, %v1027
  %v1178 = vpack.c.b16 %v1034, %v1028
  %v1179 = vpack.c.b16 %v1041, %v1035
  %v1180 = vpack.c.b16 %v1042, %v1036
  %v1181 = vpack.c.b16 %v1043, %v1037
  %v1182 = vpack.c.b16 %v1044, %v1038
  %v1183 = vpack.c.b16 %v1045, %v1039
  %v1184 = vpack.c.b16 %v1046, %v1040
  %v1185 = vpack.c.b16 %v1053, %v1047
  %v1186 = vpack.c.b16 %v1054, %v1048
  %v1187 = vpack.c.b16 %v1055, %v1049
  %v1188 = vpack.c.b16 %v1056, %v1050
  %v1189 = vpack.c.b16 %v1057, %v1051
  %v1190 = vpack.c.b16 %v1058, %v1052
  %v1191 = vpack.c.b16 %v1065, %v1059
  %v1192 = vpack.c.b16 %v1066, %v1060
  %v1193 = vpack.c.b16 %v1067, %v1061
  %v1194 = vpack.c.b16 %v1068, %v1062
  %v1195 = vpack.c.b16 %v1069, %v1063
  %v1196 = vpack.c.b16 %v1070, %v1064
  %v1197 = vpack.c.b16 %v1077, %v1071
  %v1198 = vpack.c.b16 %v1078, %v1072
  %v1199 = vpack.c.b16 %v1079, %v1073
  %v1200 = vpack.c.b16 %v1080, %v1074
  %v1201 = vpack.c.b16 %v1081, %v1075
  %v1202 = vpack.c.b16 %v1082, %v1076
  %v1203 = vpack.c.b16 %v1089, %v1083
  %v1204 = vpack.c.b16 %v1090, %v1084
  %v1205 = vpack.c.b16 %v1091, %v1085
  %v1206 = vpack.c.b16 %v1092, %v1086
  %v1207 = vpack.c.b16 %v1093, %v1087
  %v1208 = vpack.c.b16 %v1094, %v1088
  %v1209 = vpack.c.b16 %v1101, %v1095
  %v1210 = vpack.c.b16 %v1102, %v1096
  %v1211 = vpack.c.b16 %v1103, %v1097
  %v1212 = vpack.c.b16 %v1104, %v1098
  %v1213 = vpack.c.b16 %v1105, %v1099
  %v1214 = vpack.c.b16 %v1106, %v1100
  %v1215 = vpack.c.b16 %v1113, %v1107
  %v1216 = vpack.c.b16 %v1114, %v1108
  %v1217 = vpack.c.b16 %v1115, %v1109
  %v1218 = vpack.c.b16 %v1116, %v1110
  %v1219 = vpack.c.b16 %v1117, %v1111
  %v1220 = vpack.c.b16 %v1118, %v1112
  %v1221 = vpack.c.b16 %v1125, %v1119
  %v1222 = vpack.c.b16 %v1126, %v1120
  %v1223 = vpack.c.b16 %v1127, %v1121
  %v1224 = vpack.c.b16 %v1128, %v1122
  %v1225 = vpack.c.b16 %v1129, %v1123
  %v1226 = vpack.c.b16 %v1130, %v1124
  %v1227 = vpack.c.b16 %v1137, %v1131
  %v1228 = vpack.c.b16 %v1138, %v1132
  %v1229 = vpack.c.b16 %v1139, %v1133
  %v1230 = vpack.c.b16 %v1140, %v1134
  %v1231 = vpack.c.b16 %v1141, %v1135
  %v1232 = vpack.c.b16 %v1142, %v1136
  %v1233 = vpack.c.b16 %v1149, %v1143
  %v1234 = vpack.c.b16 %v1150, %v1144
  %v1235 = vpack.c.b16 %v1151, %v1145
  %v1236 = vpack.c.b16 %v1152, %v1146
  %v1237 = vpack.c.b16 %v1153, %v1147
  %v1238 = vpack.c.b16 %v1154, %v1148
  %v1239 = vpack.c.b16 %v1161, %v1155
  %v1240 = vpack.c.b16 %v1162, %v1156
  %v1241 = vpack.c.b16 %v1163, %v1157
  %v1242 = vpack.c.b16 %v1164, %v1158
  %v1243 = vpack.c.b16 %v1165, %v1159
  %v1244 = vpack.c.b16 %v1166, %v1160
  %v1245 = vpack.c.b16 %v1167, %v1167
  %v1246 = vpack.c.b16 %v1168, %v1168
  %v1247 = vpack.c.b16 %v1169, %v1169
  %v1248 = vpack.c.b16 %v1170, %v1170
  %v1249 = vpack.c.b16 %v1171, %v1171
  %v1250 = vpack.c.b16 %v1172, %v1172
  %vm1323 = vcmask 588800
  %v1325 = vsel %vm1323, %v946, 0
  %vm1327 = vcmask 1043456
  %v1329 = vsel %vm1327, %v1245, 0
  %v1332 = vsel %vm1327, %v1246, 0
  %v1335 = vsel %vm1327, %v1247, 0
  %v1338 = vsel %vm1327, %v1248, 0
  %v1341 = vsel %vm1327, %v1249, 0
  %v1344 = vsel %vm1327, %v1250, 0
  %1346 = vmatpush.bf16.msra.mxu0 %v1215
  %1347 = vmatpush.bf16.msra.mxu0 %v1209
  %1348 = vmatpush.bf16.msra.mxu0 %v1203
  %1349 = vmatpush.bf16.msra.mxu0 %v1197
  %1350 = vmatpush.bf16.msra.mxu0 %v1191
  %1351 = vmatpush.bf16.msra.mxu0 %v1185
  %1352 = vmatpush.bf16.msra.mxu0 %v1179
  %1353 = vmatpush.bf16.msra.mxu0 %v1173
  %1354 = vmatmul.bf16.gmra.mxu0 %v945
  %v1355 = vpop.f32.mrf.mxu0
  %v1356 = vadd.f32 0.0, %v1355
  %v1357 = vpop.f32.mrf.mxu0
  %v1358 = vadd.f32 0.0, %v1357
  %1359 = vdwg.mxu0
  %1360 = vmatpush.bf16.msra.mxu0 0
  %1361 = vmatpush.bf16.msra.mxu0 0
  %1362 = vmatpush.bf16.msra.mxu0 0
  %1363 = vmatpush.bf16.msra.mxu0 %v1329
  %1364 = vmatpush.bf16.msra.mxu0 %v1239
  %1365 = vmatpush.bf16.msra.mxu0 %v1233
  %1366 = vmatpush.bf16.msra.mxu0 %v1227
  %1367 = vmatpush.bf16.msra.mxu0 %v1221
  %1368 = vmatmul.bf16.gmra.mxu0 %v1325
  %v1369 = vpop.f32.mrf.mxu0
  %v1370 = vadd.f32 %v1356, %v1369
  %v1371 = vpop.f32.mrf.mxu0
  %v1372 = vadd.f32 %v1358, %v1371
  %1373 = vdwg.mxu0
  %1374 = vmatpush.bf16.msra.mxu0 %v1216
  %1375 = vmatpush.bf16.msra.mxu0 %v1210
  %1376 = vmatpush.bf16.msra.mxu0 %v1204
  %1377 = vmatpush.bf16.msra.mxu0 %v1198
  %1378 = vmatpush.bf16.msra.mxu0 %v1192
  %1379 = vmatpush.bf16.msra.mxu0 %v1186
  %1380 = vmatpush.bf16.msra.mxu0 %v1180
  %1381 = vmatpush.bf16.msra.mxu0 %v1174
  %1382 = vmatmul.bf16.gmra.mxu0 %v945
  %v1383 = vpop.f32.mrf.mxu0
  %v1384 = vadd.f32 0.0, %v1383
  %v1385 = vpop.f32.mrf.mxu0
  %v1386 = vadd.f32 0.0, %v1385
  %1387 = vdwg.mxu0
  %1388 = vmatpush.bf16.msra.mxu0 0
  %1389 = vmatpush.bf16.msra.mxu0 0
  %1390 = vmatpush.bf16.msra.mxu0 0
  %1391 = vmatpush.bf16.msra.mxu0 %v1332
  %1392 = vmatpush.bf16.msra.mxu0 %v1240
  %1393 = vmatpush.bf16.msra.mxu0 %v1234
  %1394 = vmatpush.bf16.msra.mxu0 %v1228
  %1395 = vmatpush.bf16.msra.mxu0 %v1222
  %1396 = vmatmul.bf16.gmra.mxu0 %v1325
  %v1397 = vpop.f32.mrf.mxu0
  %v1398 = vadd.f32 %v1384, %v1397
  %v1399 = vpop.f32.mrf.mxu0
  %v1400 = vadd.f32 %v1386, %v1399
  %1401 = vdwg.mxu0
  %1402 = vmatpush.bf16.msra.mxu0 %v1217
  %1403 = vmatpush.bf16.msra.mxu0 %v1211
  %1404 = vmatpush.bf16.msra.mxu0 %v1205
  %1405 = vmatpush.bf16.msra.mxu0 %v1199
  %1406 = vmatpush.bf16.msra.mxu0 %v1193
  %1407 = vmatpush.bf16.msra.mxu0 %v1187
  %1408 = vmatpush.bf16.msra.mxu0 %v1181
  %1409 = vmatpush.bf16.msra.mxu0 %v1175
  %1410 = vmatmul.bf16.gmra.mxu0 %v945
  %v1411 = vpop.f32.mrf.mxu0
  %v1412 = vadd.f32 0.0, %v1411
  %v1413 = vpop.f32.mrf.mxu0
  %v1414 = vadd.f32 0.0, %v1413
  %1415 = vdwg.mxu0
  %1416 = vmatpush.bf16.msra.mxu0 0
  %1417 = vmatpush.bf16.msra.mxu0 0
  %1418 = vmatpush.bf16.msra.mxu0 0
  %1419 = vmatpush.bf16.msra.mxu0 %v1335
  %1420 = vmatpush.bf16.msra.mxu0 %v1241
  %1421 = vmatpush.bf16.msra.mxu0 %v1235
  %1422 = vmatpush.bf16.msra.mxu0 %v1229
  %1423 = vmatpush.bf16.msra.mxu0 %v1223
  %1424 = vmatmul.bf16.gmra.mxu0 %v1325
  %v1425 = vpop.f32.mrf.mxu0
  %v1426 = vadd.f32 %v1412, %v1425
  %v1427 = vpop.f32.mrf.mxu0
  %v1428 = vadd.f32 %v1414, %v1427
  %1429 = vdwg.mxu0
  %1430 = vmatpush.bf16.msra.mxu0 %v1218
  %1431 = vmatpush.bf16.msra.mxu0 %v1212
  %1432 = vmatpush.bf16.msra.mxu0 %v1206
  %1433 = vmatpush.bf16.msra.mxu0 %v1200
  %1434 = vmatpush.bf16.msra.mxu0 %v1194
  %1435 = vmatpush.bf16.msra.mxu0 %v1188
  %1436 = vmatpush.bf16.msra.mxu0 %v1182
  %1437 = vmatpush.bf16.msra.mxu0 %v1176
  %1438 = vmatmul.bf16.gmra.mxu0 %v945
  %v1439 = vpop.f32.mrf.mxu0
  %v1440 = vadd.f32 0.0, %v1439
  %v1441 = vpop.f32.mrf.mxu0
  %v1442 = vadd.f32 0.0, %v1441
  %1443 = vdwg.mxu0
  %1444 = vmatpush.bf16.msra.mxu0 0
  %1445 = vmatpush.bf16.msra.mxu0 0
  %1446 = vmatpush.bf16.msra.mxu0 0
  %1447 = vmatpush.bf16.msra.mxu0 %v1338
  %1448 = vmatpush.bf16.msra.mxu0 %v1242
  %1449 = vmatpush.bf16.msra.mxu0 %v1236
  %1450 = vmatpush.bf16.msra.mxu0 %v1230
  %1451 = vmatpush.bf16.msra.mxu0 %v1224
  %1452 = vmatmul.bf16.gmra.mxu0 %v1325
  %v1453 = vpop.f32.mrf.mxu0
  %v1454 = vadd.f32 %v1440, %v1453
  %v1455 = vpop.f32.mrf.mxu0
  %v1456 = vadd.f32 %v1442, %v1455
  %1457 = vdwg.mxu0
  %1458 = vmatpush.bf16.msra.mxu0 %v1219
  %1459 = vmatpush.bf16.msra.mxu0 %v1213
  %1460 = vmatpush.bf16.msra.mxu0 %v1207
  %1461 = vmatpush.bf16.msra.mxu0 %v1201
  %1462 = vmatpush.bf16.msra.mxu0 %v1195
  %1463 = vmatpush.bf16.msra.mxu0 %v1189
  %1464 = vmatpush.bf16.msra.mxu0 %v1183
  %1465 = vmatpush.bf16.msra.mxu0 %v1177
  %1466 = vmatmul.bf16.gmra.mxu0 %v945
  %v1467 = vpop.f32.mrf.mxu0
  %v1468 = vadd.f32 0.0, %v1467
  %v1469 = vpop.f32.mrf.mxu0
  %v1470 = vadd.f32 0.0, %v1469
  %1471 = vdwg.mxu0
  %1472 = vmatpush.bf16.msra.mxu0 0
  %1473 = vmatpush.bf16.msra.mxu0 0
  %1474 = vmatpush.bf16.msra.mxu0 0
  %1475 = vmatpush.bf16.msra.mxu0 %v1341
  %1476 = vmatpush.bf16.msra.mxu0 %v1243
  %1477 = vmatpush.bf16.msra.mxu0 %v1237
  %1478 = vmatpush.bf16.msra.mxu0 %v1231
  %1479 = vmatpush.bf16.msra.mxu0 %v1225
  %1480 = vmatmul.bf16.gmra.mxu0 %v1325
  %v1481 = vpop.f32.mrf.mxu0
  %v1482 = vadd.f32 %v1468, %v1481
  %v1483 = vpop.f32.mrf.mxu0
  %v1484 = vadd.f32 %v1470, %v1483
  %1485 = vdwg.mxu0
  %1486 = vmatpush.bf16.msra.mxu0 %v1220
  %1487 = vmatpush.bf16.msra.mxu0 %v1214
  %1488 = vmatpush.bf16.msra.mxu0 %v1208
  %1489 = vmatpush.bf16.msra.mxu0 %v1202
  %1490 = vmatpush.bf16.msra.mxu0 %v1196
  %1491 = vmatpush.bf16.msra.mxu0 %v1190
  %1492 = vmatpush.bf16.msra.mxu0 %v1184
  %1493 = vmatpush.bf16.msra.mxu0 %v1178
  %1494 = vmatmul.bf16.gmra.mxu0 %v945
  %v1495 = vpop.f32.mrf.mxu0
  %v1496 = vadd.f32 0.0, %v1495
  %v1497 = vpop.f32.mrf.mxu0
  %v1498 = vadd.f32 0.0, %v1497
  %1499 = vdwg.mxu0
  %1500 = vmatpush.bf16.msra.mxu0 0
  %1501 = vmatpush.bf16.msra.mxu0 0
  %1502 = vmatpush.bf16.msra.mxu0 0
  %1503 = vmatpush.bf16.msra.mxu0 %v1344
  %1504 = vmatpush.bf16.msra.mxu0 %v1244
  %1505 = vmatpush.bf16.msra.mxu0 %v1238
  %1506 = vmatpush.bf16.msra.mxu0 %v1232
  %1507 = vmatpush.bf16.msra.mxu0 %v1226
  %1508 = vmatmul.bf16.gmra.mxu0 %v1325
  %v1509 = vpop.f32.mrf.mxu0
  %v1510 = vadd.f32 %v1496, %v1509
  %v1511 = vpop.f32.mrf.mxu0
  %v1512 = vadd.f32 %v1498, %v1511
  %1513 = vdwg.mxu0
  %1514 = vst [vmem:[%s2] sm:$0xff] %v1370
  %1515 = vst [vmem:[%s2 + $0x8] sm:$0xff] %v1398
  %1516 = vst [vmem:[%s2 + $0x10] sm:$0xff] %v1426
  %1517 = vst [vmem:[%s2 + $0x18] sm:$0xff] %v1372
  %1518 = vst [vmem:[%s2 + $0x20] sm:$0xff] %v1400
  %1519 = vst [vmem:[%s2 + $0x28] sm:$0xff] %v1428
  %s1520 = scalar_lea.vmem %s2, 48
  %1521 = vst [vmem:[%s1520] sm:$0xff] %v1454
  %1522 = vst [vmem:[%s1520 + $0x8] sm:$0xff] %v1482
  %1523 = vst [vmem:[%s1520 + $0x10] sm:$0xff] %v1510
  %1524 = vst [vmem:[%s1520 + $0x18] sm:$0xff] %v1456
  %1525 = vst [vmem:[%s1520 + $0x20] sm:$0xff] %v1484
  %1526 = vst [vmem:[%s1520 + $0x28] sm:$0xff] %v1512
  // Predicated region
  $region10: #{soft_hebb_conv2d_forward.1} parent=0 // pred_check
    _
  $region11: #{soft_hebb_conv2d_forward.1} parent=0 // pred_check_branch
    %1528 = sbr.rel (0) target = $region13
  $region12: #{soft_hebb_conv2d_forward.1} parent=0 // pred_region
    _
  $region13: #{soft_hebb_conv2d_forward.1} parent=0 // pred_fallthru
    _
  // Predicated region
  $region14: #{soft_hebb_conv2d_forward.1} parent=0 // pred_check
    _
  $region15: #{soft_hebb_conv2d_forward.1} parent=0 // pred_check_branch
    %1530 = sbr.rel (0) target = $region17
  $region16: #{soft_hebb_conv2d_forward.1} parent=0 // pred_region
    _
  $region17: #{soft_hebb_conv2d_forward.1} parent=0 // pred_fallthru
    _

</llo_original>
